<compile_context>
chip_gen: v5e
topology: v5e:2x2
jax: 0.10.0
libtpu: 0.0.40
codegen_flags: <defaults>
</compile_context>

<pallas_src>
import jax
import jax.numpy as jnp
from jax.experimental import pallas as pl
from jax.experimental.pallas import tpu as pltpu

PACK = 16            # batch rows folded into one lane-dense packed row
OBS_DIM = 8
H1, H2, OUT = 64, 32, 2


def _round_up(x, m):
    return ((x + m - 1) // m) * m


def _cdiv(a, b):
    return -(-a // b)


def _padded_vmem_bytes(rows, cols, itemsize):
    # VMEM blocks are padded to (8, 128) tiles.
    return _round_up(max(rows, 1), 8) * _round_up(max(cols, 1), 128) * itemsize


# ----------------------------------------------------------------------------
# Kernel
# ----------------------------------------------------------------------------
def _blocker_mlp_kernel(obs_ref, act_ref, w1o_ref, w1a_ref, b1_ref,
                        w2_ref, b2_ref, w3_ref, b3_ref, o_ref):
    """One batch tile of the packed 3-layer MLP.

    Every activation ref is in the packed layout (each row = PACK batch rows),
    weights are block-diagonal kron(I_PACK, W), so plain dense dots reproduce
    the per-row Linear exactly.  Activations are cast to the weight dtype
    inside the kernel; accumulation / bias / ReLU stay f32.
    """
    cdt = w1o_ref.dtype

    # fc1 (the obs/action concat is fused by splitting W1 into two halves)
    h1 = jnp.dot(obs_ref[...].astype(cdt), w1o_ref[...],
                 preferred_element_type=jnp.float32)
    h1 = h1 + jnp.dot(act_ref[...].astype(cdt), w1a_ref[...],
                      preferred_element_type=jnp.float32)
    h1 = jnp.maximum(h1 + b1_ref[...], 0.0)

    # fc2
    h2 = jnp.dot(h1.astype(w2_ref.dtype), w2_ref[...],
                 preferred_element_type=jnp.float32)
    h2 = jnp.maximum(h2 + b2_ref[...], 0.0)

    # fc_out
    out = jnp.dot(h2.astype(w3_ref.dtype), w3_ref[...],
                  preferred_element_type=jnp.float32)
    o_ref[...] = (out + b3_ref[...]).astype(o_ref.dtype)


# ----------------------------------------------------------------------------
# Parameter handling
# ----------------------------------------------------------------------------
def init_blocker_params(action_size, key):
    """Init mimicking torch.nn.Linear default U[-1/sqrt(fan_in), +].

    fc1 weight is stored pre-split (obs part / action part) and pre-transposed
    to (in_features, out_features) so the math is x @ W + b.
    """
    in1 = OBS_DIM + action_size
    ks = jax.random.split(key, 6)

    def lin(kw, kb, fan_in, fan_out):
        bound = 1.0 / jnp.sqrt(float(fan_in))
        w = jax.random.uniform(kw, (fan_in, fan_out), jnp.float32, -bound, bound)
        b = jax.random.uniform(kb, (1, fan_out), jnp.float32, -bound, bound)
        return w, b

    w1, b1 = lin(ks[0], ks[1], in1, H1)
    w2, b2 = lin(ks[2], ks[3], H1, H2)
    w3, b3 = lin(ks[4], ks[5], H2, OUT)
    return {
        "w1_obs": w1[:OBS_DIM], "w1_act": w1[OBS_DIM:], "b1": b1,
        "w2": w2, "b2": b2,
        "w3": w3, "b3": b3,
    }


def pack_blocker_params(params, *, compute_dtype=jnp.float32):
    """Build the packed (block-diagonal) weights.  Do this ONCE per model.

    kron(I_PACK, W) is block-diagonal with PACK copies of W, so
    packed_x @ kron(I, W) == per-row (x @ W) in the packed layout.
    Weights carry the compute dtype (f32 or bf16); biases stay f32.
    """
    eye = jnp.eye(PACK, dtype=jnp.float32)

    def blockdiag(w):
        return jnp.kron(eye, w).astype(compute_dtype)

    def tile_bias(b):
        return jnp.tile(b.astype(jnp.float32), (1, PACK))

    return {
        "w1_obs": blockdiag(params["w1_obs"]),   # (128,   PACK*64)
        "w1_act": blockdiag(params["w1_act"]),   # (PACK*A, PACK*64)
        "w2":     blockdiag(params["w2"]),       # (PACK*64, PACK*32)
        "w3":     blockdiag(params["w3"]),       # (PACK*32, PACK*2)
        "b1":     tile_bias(params["b1"]),       # (1, PACK*64)
        "b2":     tile_bias(params["b2"]),       # (1, PACK*32)
        "b3":     tile_bias(params["b3"]),       # (1, PACK*2)
    }


# ----------------------------------------------------------------------------
# Forward wrapper
# ----------------------------------------------------------------------------
def blocker_model_forward(obs, action, packed_params, *,
                          block_batch=8192,
                          vmem_limit_bytes=32 * 1024 * 1024):
    """Forward pass of BlockerModel as a single batched Pallas TPU kernel.

    obs:    (B, 8)  float32 (or bfloat16)
    action: (B, A)  float32 (or bfloat16)
    packed_params: output of pack_blocker_params (block-diagonal weights).
    Returns (B, 2) float32.
    """
    B = obs.shape[0]
    A = action.shape[1]

    w1o = packed_params["w1_obs"]
    w1a = packed_params["w1_act"]
    w2 = packed_params["w2"]
    w3 = packed_params["w3"]
    b1 = packed_params["b1"]
    b2 = packed_params["b2"]
    b3 = packed_params["b3"]

    # ---- pack the batch (zero-copy reshape when B % PACK == 0) -------------
    b_pad = _round_up(B, PACK)
    if b_pad != B:
        pad = b_pad - B
        obs = jnp.pad(obs, ((0, pad), (0, 0)))
        action = jnp.pad(action, ((0, pad), (0, 0)))
    rows = b_pad // PACK
    obs_p = obs.reshape(rows, PACK * OBS_DIM)     # (rows, 128)  lane-dense
    act_p = action.reshape(rows, PACK * A)        # (rows, 16*A)

    # ---- pick the packed-row tile size --------------------------------------
    tbp_cap = max(8, (block_batch // PACK) // 8 * 8)
    if rows <= tbp_cap:
        tbp = rows                                # single full-extent block
    else:
        # Big tiles amortize ~0.35us/step overhead; keep >=4 steps so both
        # v7x TensorCores get grid steps under the "parallel" axis.
        tbp = min(tbp_cap, _round_up(_cdiv(rows, 4), 8))

    # Padded-VMEM footprint guard (re-derived for v7x's 64 MiB physical VMEM).
    act_isz = jnp.dtype(obs.dtype).itemsize
    weight_bytes = sum(
        _padded_vmem_bytes(a.shape[0], a.shape[1], jnp.dtype(a.dtype).itemsize)
        for a in (w1o, w1a, b1, w2, b2, w3, b3))

    def step_bytes(t):
        io = (_padded_vmem_bytes(t, PACK * OBS_DIM, act_isz)
              + _padded_vmem_bytes(t, PACK * A, act_isz)
              + _padded_vmem_bytes(t, PACK * OUT, 4))
        inter = (_padded_vmem_bytes(t, PACK * H1, 4)
                 + _padded_vmem_bytes(t, PACK * H2, 4))
        return 2 * io + inter + 2 * weight_bytes  # 2x = double buffering

    budget = int(0.75 * vmem_limit_bytes)
    while tbp > 8 and step_bytes(tbp) > budget:
        tbp = max(8, _round_up(tbp // 2, 8))
    nb = _cdiv(rows, tbp)

    # ---- BlockSpecs ----------------------------------------------------------
    def batch_spec(feat):
        return pl.BlockSpec((tbp, feat), lambda i: (i, 0))

    def resident_spec(arr):
        # Constant index map: DMA'd once, stays VMEM-resident across the grid.
        return pl.BlockSpec(arr.shape, lambda i: (0, 0))

    out_p = pl.pallas_call(
        _blocker_mlp_kernel,
        out_shape=jax.ShapeDtypeStruct((rows, PACK * OUT), jnp.float32),
        grid=(nb,),
        in_specs=[
            batch_spec(PACK * OBS_DIM),   # packed obs
            batch_spec(PACK * A),         # packed action
            resident_spec(w1o),
            resident_spec(w1a),
            resident_spec(b1),
            resident_spec(w2),
            resident_spec(b2),
            resident_spec(w3),
            resident_spec(b3),
        ],
        out_specs=pl.BlockSpec((tbp, PACK * OUT), lambda i: (i, 0)),
        compiler_params=pltpu.CompilerParams(
            dimension_semantics=("parallel",),     # megacore sharding on v7x
            vmem_limit_bytes=int(vmem_limit_bytes),
        ),
    )(obs_p, act_p, w1o, w1a, b1, w2, b2, w3, b3)

    # Free reshape back to (B, 2); drop the zero-padded tail rows.
    return out_p.reshape(b_pad, OUT)[:B]


# ----------------------------------------------------------------------------
# Pure-JAX reference (matches the PyTorch module exactly: concat -> Linear)
# ----------------------------------------------------------------------------
def _reference_forward(obs, action, params):
    w1_full = jnp.concatenate([params["w1_obs"], params["w1_act"]], axis=0)
    x = jnp.concatenate([obs, action], axis=1)
    x = jax.nn.relu(x @ w1_full + params["b1"])
    x = jax.nn.relu(x @ params["w2"] + params["b2"])
    return x @ params["w3"] + params["b3"]


if __name__ == "__main__":
    key = jax.random.PRNGKey(0)
    k1, k2, k3, k4, k5 = jax.random.split(key, 5)
    action_size = 4

    params = init_blocker_params(action_size, k3)
    packed = pack_blocker_params(params)                       # f32 weights

    # Case 1: small batch, multiple of PACK (zero-copy packing path, 1 step).
    B1 = 128
    obs1 = jax.random.normal(k1, (B1, OBS_DIM), dtype=jnp.float32)
    act1 = jax.random.normal(k2, (B1, action_size), dtype=jnp.float32)
    ref1 = _reference_forward(obs1, act1, params)
    out1 = jax.block_until_ready(blocker_model_forward(obs1, act1, packed))
    assert out1.shape == (B1, 2)
    assert jnp.allclose(out1, ref1, atol=1e-5, rtol=1e-5)

    # Case 2: multi-step grid + partial final block + B not multiple of PACK.
    B2 = 1000
    obs2 = jax.random.normal(k4, (B2, OBS_DIM), dtype=jnp.float32)
    act2 = jax.random.normal(k5, (B2, action_size), dtype=jnp.float32)
    ref2 = _reference_forward(obs2, act2, params)
    out2 = jax.block_until_ready(
        blocker_model_forward(obs2, act2, packed, block_batch=256))
    assert out2.shape == (B2, 2)
    assert jnp.allclose(out2, ref2, atol=1e-5, rtol=1e-5)

    # Case 3: bf16 MXU-input path.  Weights are packed in bf16 once; the f32
    # activations are cast to bf16 INSIDE the kernel after the DMA (no
    # wrapper-side cast pass).  Accumulation stays f32 -> relaxed tolerance.
    packed_bf16 = pack_blocker_params(params, compute_dtype=jnp.bfloat16)
    out3 = jax.block_until_ready(
        blocker_model_forward(obs1, act1, packed_bf16))
    assert out3.shape == (B1, 2)
    assert jnp.allclose(out3, ref1, atol=5e-2, rtol=5e-2)

    print("KERNEL_OK")
</pallas_src>

<mosaic_0001>
module attributes {stable_mosaic.version = 11 : i64} {
  func.func @_blocker_mlp_kernel(%arg0: i32, %arg1: memref<8x128xf32, #tpu.memory_space<vmem>>, %arg2: memref<8x64xf32, #tpu.memory_space<vmem>>, %arg3: memref<128x1024xf32, #tpu.memory_space<vmem>>, %arg4: memref<64x1024xf32, #tpu.memory_space<vmem>>, %arg5: memref<1x1024xf32, #tpu.memory_space<vmem>>, %arg6: memref<1024x512xf32, #tpu.memory_space<vmem>>, %arg7: memref<1x512xf32, #tpu.memory_space<vmem>>, %arg8: memref<512x32xf32, #tpu.memory_space<vmem>>, %arg9: memref<1x32xf32, #tpu.memory_space<vmem>>, %arg10: memref<8x32xf32, #tpu.memory_space<vmem>>) attributes {dimension_semantics = [#tpu.dimension_semantics<parallel>], iteration_bounds = array<i64: 1>, scalar_prefetch = 0 : i64, scratch_operands = 0 : i64, tpu.core_type = #tpu.core_type<tc>, window_params = [{transform_indices = @transform_0, window_bounds = array<i64: 8, 128>}, {transform_indices = @transform_1, window_bounds = array<i64: 8, 64>}, {pipeline_mode = #tpu.pipeline_mode<synchronous>, transform_indices = @transform_2, window_bounds = array<i64: 128, 1024>}, {pipeline_mode = #tpu.pipeline_mode<synchronous>, transform_indices = @transform_3, window_bounds = array<i64: 64, 1024>}, {pipeline_mode = #tpu.pipeline_mode<synchronous>, transform_indices = @transform_4, window_bounds = array<i64: 1, 1024>}, {pipeline_mode = #tpu.pipeline_mode<synchronous>, transform_indices = @transform_5, window_bounds = array<i64: 1024, 512>}, {pipeline_mode = #tpu.pipeline_mode<synchronous>, transform_indices = @transform_6, window_bounds = array<i64: 1, 512>}, {pipeline_mode = #tpu.pipeline_mode<synchronous>, transform_indices = @transform_7, window_bounds = array<i64: 512, 32>}, {pipeline_mode = #tpu.pipeline_mode<synchronous>, transform_indices = @transform_8, window_bounds = array<i64: 1, 32>}, {transform_indices = @transform_9, window_bounds = array<i64: 8, 32>}]} {
    %c0 = arith.constant 0 : index
    %c0_0 = arith.constant 0 : index
    %0 = vector.load %arg1[%c0, %c0_0] : memref<8x128xf32, #tpu.memory_space<vmem>>, vector<8x128xf32>
    %c0_1 = arith.constant 0 : index
    %c0_2 = arith.constant 0 : index
    %1 = vector.load %arg3[%c0_1, %c0_2] : memref<128x1024xf32, #tpu.memory_space<vmem>>, vector<128x1024xf32>
    %cst = arith.constant dense<0.000000e+00> : vector<8x1024xf32>
    %2 = tpu.matmul %0, %1, %cst {dimension_numbers = #tpu.dot_dimension_numbers<[1], [0], [0], [1], [0, 0, 1, 1], [], []>} : vector<8x128xf32>, vector<128x1024xf32>, vector<8x1024xf32> -> vector<8x1024xf32>
    %c0_3 = arith.constant 0 : index
    %c0_4 = arith.constant 0 : index
    %3 = vector.load %arg2[%c0_3, %c0_4] : memref<8x64xf32, #tpu.memory_space<vmem>>, vector<8x64xf32>
    %c0_5 = arith.constant 0 : index
    %c0_6 = arith.constant 0 : index
    %4 = vector.load %arg4[%c0_5, %c0_6] : memref<64x1024xf32, #tpu.memory_space<vmem>>, vector<64x1024xf32>
    %cst_7 = arith.constant dense<0.000000e+00> : vector<8x1024xf32>
    %5 = tpu.matmul %3, %4, %cst_7 {dimension_numbers = #tpu.dot_dimension_numbers<[1], [0], [0], [1], [0, 0, 1, 1], [], []>} : vector<8x64xf32>, vector<64x1024xf32>, vector<8x1024xf32> -> vector<8x1024xf32>
    %6 = arith.addf %2, %5 : vector<8x1024xf32>
    %c0_8 = arith.constant 0 : index
    %c0_9 = arith.constant 0 : index
    %7 = vector.load %arg5[%c0_8, %c0_9] : memref<1x1024xf32, #tpu.memory_space<vmem>>, vector<1x1024xf32>
    %8 = vector.broadcast %7 : vector<1x1024xf32> to vector<8x1024xf32>
    %9 = arith.addf %6, %8 : vector<8x1024xf32>
    %cst_10 = arith.constant 0.000000e+00 : f32
    %10 = vector.broadcast %cst_10 : f32 to vector<8x1024xf32>
    %11 = arith.maximumf %9, %10 : vector<8x1024xf32>
    %c0_11 = arith.constant 0 : index
    %c0_12 = arith.constant 0 : index
    %12 = vector.load %arg6[%c0_11, %c0_12] : memref<1024x512xf32, #tpu.memory_space<vmem>>, vector<1024x512xf32>
    %cst_13 = arith.constant dense<0.000000e+00> : vector<8x512xf32>
    %13 = tpu.matmul %11, %12, %cst_13 {dimension_numbers = #tpu.dot_dimension_numbers<[1], [0], [0], [1], [0, 0, 1, 1], [], []>} : vector<8x1024xf32>, vector<1024x512xf32>, vector<8x512xf32> -> vector<8x512xf32>
    %c0_14 = arith.constant 0 : index
    %c0_15 = arith.constant 0 : index
    %14 = vector.load %arg7[%c0_14, %c0_15] : memref<1x512xf32, #tpu.memory_space<vmem>>, vector<1x512xf32>
    %15 = vector.broadcast %14 : vector<1x512xf32> to vector<8x512xf32>
    %16 = arith.addf %13, %15 : vector<8x512xf32>
    %cst_16 = arith.constant 0.000000e+00 : f32
    %17 = vector.broadcast %cst_16 : f32 to vector<8x512xf32>
    %18 = arith.maximumf %16, %17 : vector<8x512xf32>
    %c0_17 = arith.constant 0 : index
    %c0_18 = arith.constant 0 : index
    %19 = vector.load %arg8[%c0_17, %c0_18] : memref<512x32xf32, #tpu.memory_space<vmem>>, vector<512x32xf32>
    %cst_19 = arith.constant dense<0.000000e+00> : vector<8x32xf32>
    %20 = tpu.matmul %18, %19, %cst_19 {dimension_numbers = #tpu.dot_dimension_numbers<[1], [0], [0], [1], [0, 0, 1, 1], [], []>} : vector<8x512xf32>, vector<512x32xf32>, vector<8x32xf32> -> vector<8x32xf32>
    %c0_20 = arith.constant 0 : index
    %c0_21 = arith.constant 0 : index
    %21 = vector.load %arg9[%c0_20, %c0_21] : memref<1x32xf32, #tpu.memory_space<vmem>>, vector<1x32xf32>
    %22 = vector.broadcast %21 : vector<1x32xf32> to vector<8x32xf32>
    %23 = arith.addf %20, %22 : vector<8x32xf32>
    %c0_22 = arith.constant 0 : index
    %c0_23 = arith.constant 0 : index
    %24 = vector.load %arg10[%c0_22, %c0_23] : memref<8x32xf32, #tpu.memory_space<vmem>>, vector<8x32xf32>
    tpu.vector_store %arg10[%c0_22, %c0_23], %23 {strides = array<i32>} : memref<8x32xf32, #tpu.memory_space<vmem>>, vector<8x32xf32>,
    return
  }
  func.func @transform_0(%arg0: i32) -> (i32, i32) {
    %c0_i32 = arith.constant 0 : i32
    %c0_i32_0 = arith.constant 0 : i32
    return %arg0, %c0_i32 : i32, i32
  }
  func.func @transform_1(%arg0: i32) -> (i32, i32) {
    %c0_i32 = arith.constant 0 : i32
    %c0_i32_0 = arith.constant 0 : i32
    return %arg0, %c0_i32 : i32, i32
  }
  func.func @transform_2(%arg0: i32) -> (i32, i32) {
    %c0_i32 = arith.constant 0 : i32
    %c0_i32_0 = arith.constant 0 : i32
    %c0_i32_1 = arith.constant 0 : i32
    return %c0_i32, %c0_i32_0 : i32, i32
  }
  func.func @transform_3(%arg0: i32) -> (i32, i32) {
    %c0_i32 = arith.constant 0 : i32
    %c0_i32_0 = arith.constant 0 : i32
    %c0_i32_1 = arith.constant 0 : i32
    return %c0_i32, %c0_i32_0 : i32, i32
  }
  func.func @transform_4(%arg0: i32) -> (i32, i32) {
    %c0_i32 = arith.constant 0 : i32
    %c0_i32_0 = arith.constant 0 : i32
    %c0_i32_1 = arith.constant 0 : i32
    return %c0_i32, %c0_i32_0 : i32, i32
  }
  func.func @transform_5(%arg0: i32) -> (i32, i32) {
    %c0_i32 = arith.constant 0 : i32
    %c0_i32_0 = arith.constant 0 : i32
    %c0_i32_1 = arith.constant 0 : i32
    return %c0_i32, %c0_i32_0 : i32, i32
  }
  func.func @transform_6(%arg0: i32) -> (i32, i32) {
    %c0_i32 = arith.constant 0 : i32
    %c0_i32_0 = arith.constant 0 : i32
    %c0_i32_1 = arith.constant 0 : i32
    return %c0_i32, %c0_i32_0 : i32, i32
  }
  func.func @transform_7(%arg0: i32) -> (i32, i32) {
    %c0_i32 = arith.constant 0 : i32
    %c0_i32_0 = arith.constant 0 : i32
    %c0_i32_1 = arith.constant 0 : i32
    return %c0_i32, %c0_i32_0 : i32, i32
  }
  func.func @transform_8(%arg0: i32) -> (i32, i32) {
    %c0_i32 = arith.constant 0 : i32
    %c0_i32_0 = arith.constant 0 : i32
    %c0_i32_1 = arith.constant 0 : i32
    return %c0_i32, %c0_i32_0 : i32, i32
  }
  func.func @transform_9(%arg0: i32) -> (i32, i32) {
    %c0_i32 = arith.constant 0 : i32
    %c0_i32_0 = arith.constant 0 : i32
    return %arg0, %c0_i32 : i32, i32
  }
}

</mosaic_0001>

<llo_original>
// kernel: tpu_custom_call.1
$region0: #{tpu_custom_call.1}
  #allocation0 [shape = 'u32[]', space=smem, size = 0x4, offset = 0x4, fixed_abs, tag = 'smem constant byte address 0x4 - core index']
  #allocation1 [shape = 'u32[72,128]{1,0:T(1,128)}', space=vmem, size = 0x9000, scoped, tag = 'internal scratch']
  %s0 = inlined_call_operand.hbm [shape: f32[8,128], index: 0, kind: input, shape index: {}]
  %s1 = inlined_call_operand.hbm [shape: f32[8,64], index: 1, kind: input, shape index: {}]
  %s2 = inlined_call_operand.hbm [shape: f32[128,1024], index: 2, kind: input, shape index: {}]
  %s3 = inlined_call_operand.hbm [shape: f32[64,1024], index: 3, kind: input, shape index: {}]
  %s4 = inlined_call_operand.hbm [shape: f32[1,1024], index: 4, kind: input, shape index: {}]
  %s5 = inlined_call_operand.hbm [shape: f32[1024,512], index: 5, kind: input, shape index: {}]
  %s6 = inlined_call_operand.hbm [shape: f32[1,512], index: 6, kind: input, shape index: {}]
  %s7 = inlined_call_operand.vmem [shape: f32[512,32], index: 7, kind: input, shape index: {}]
  %s8 = inlined_call_operand.hbm [shape: f32[1,32], index: 8, kind: input, shape index: {}]
  %s9 = inlined_call_operand.hbm [shape: f32[8,32], index: 9, kind: output, shape index: {}]
  %s10 = sld [smem:[#allocation0]]
  $region78: #{tpu_custom_call.1} parent=0
    _
  %s12 = ssub.s32 1, %s10
  %s13 = scalar_select 0, %s12, %s10
  $region1: #{tpu_custom_call.1} parent=0
    #allocation2 [shape = 'u8[4096]{0}', space=vmem, size = 0x1000, scoped, tag = 'input window, operand 0, single buffered']
    #allocation3 [shape = 's32[1]{0}', space=sflag, size = 0x4, scoped, tag = 'scoped memory for tpu_custom_call.1']
    #allocation4 [shape = 's32[1]{0}', space=sflag, size = 0x4, scoped, tag = 'scoped memory for tpu_custom_call.1']
    #allocation5 [shape = 'u8[4096]{0}', space=vmem, size = 0x1000, scoped, tag = 'input window, operand 1, single buffered']
    #allocation6 [shape = 's32[1]{0}', space=sflag, size = 0x4, scoped, tag = 'scoped memory for tpu_custom_call.1']
    #allocation7 [shape = 'u8[524288]{0}', space=vmem, size = 0x80000, scoped, tag = 'input window, operand 2, single buffered']
    #allocation8 [shape = 'u8[262144]{0}', space=vmem, size = 0x40000, scoped, tag = 'input window, operand 3, single buffered']
    #allocation9 [shape = 's32[1]{0}', space=sflag, size = 0x4, scoped, tag = 'scoped memory for tpu_custom_call.1']
    #allocation10 [shape = 'u8[4096]{0}', space=vmem, size = 0x1000, scoped, tag = 'input window, operand 4, single buffered']
    #allocation11 [shape = 'u8[2097152]{0}', space=vmem, size = 0x200000, scoped, tag = 'input window, operand 5, single buffered']
    #allocation12 [shape = 's32[1]{0}', space=sflag, size = 0x4, scoped, tag = 'scoped memory for tpu_custom_call.1']
    #allocation13 [shape = 'u8[2048]{0}', space=vmem, size = 0x800, scoped, tag = 'input window, operand 6, single buffered']
    #allocation14 [shape = 'u8[512]{0}', space=vmem, size = 0x400, scoped, tag = 'input window, operand 8, single buffered']
    #allocation15 [shape = 's32[1]{0}', space=sflag, size = 0x4, scoped, tag = 'scoped memory for tpu_custom_call.1']
    #allocation16 [shape = 'u8[4096]{0}', space=vmem, size = 0x1000, scoped, tag = 'output window, operand 0, single buffered']
    %14 = vsyncpa [#allocation3], 0
    %15 = vsyncpa [#allocation6], 0
    %16 = vsyncpa [#allocation9], 0
    %17 = vsyncpa [#allocation12], 0
    %18 = vsyncpa [#allocation15], 0
    %19 = vsyncpa [#allocation4], 0
    // Predicated region
    $region2: #{tpu_custom_call.1} parent=1 // pred_check
      _
    $region3: #{tpu_custom_call.1} parent=1 // pred_check_branch
      %21 = sbr.rel (0) target = $region5
    $region4: #{tpu_custom_call.1} parent=1 // pred_region
      %23 = vsyncadd [#allocation3], 0
      %s25 = sshll.u32 %s0, 4
      %s26 = int_to_ptr.hbm [resolvable:$true] %s25
      %s27 = sshll.u32 [#allocation2], 4
      %s28 = int_to_ptr.vmem [resolvable:$true] %s27
      %30 = dma.hbm_to_vmem [thread:$0]  %s26, 128, %s28, [#allocation3]
    $region5: #{tpu_custom_call.1} parent=1 // pred_fallthru
      _
    // Predicated region
    $region6: #{tpu_custom_call.1} parent=1 // pred_check
      _
    $region7: #{tpu_custom_call.1} parent=1 // pred_check_branch
      %32 = sbr.rel (0) target = $region9
    $region8: #{tpu_custom_call.1} parent=1 // pred_region
      %34 = vsyncadd [#allocation6], 0
      %s36 = sshll.u32 %s1, 4
      %s37 = int_to_ptr.hbm [resolvable:$true] %s36
      %s38 = sshll.u32 [#allocation5], 4
      %s39 = int_to_ptr.vmem [resolvable:$true] %s38
      %41 = dma.hbm_to_vmem [thread:$0]  %s37, 128, %s39, [#allocation6]
    $region9: #{tpu_custom_call.1} parent=1 // pred_fallthru
      _
    // Predicated region
    $region10: #{tpu_custom_call.1} parent=1 // pred_check
      _
    $region11: #{tpu_custom_call.1} parent=1 // pred_check_branch
      %43 = sbr.rel (0) target = $region13
    $region12: #{tpu_custom_call.1} parent=1 // pred_region
      %45 = vsyncadd [#allocation6], 0
      %s46 = sshll.u32 %s2, 4
      %s47 = int_to_ptr.hbm [resolvable:$true] %s46
      %s48 = sshll.u32 [#allocation7], 4
      %s49 = int_to_ptr.vmem [resolvable:$true] %s48
      %54 = dma.hbm_to_vmem [thread:$0]  %s47, 16384, %s49, [#allocation6], 1024, 1024, 64
    $region13: #{tpu_custom_call.1} parent=1 // pred_fallthru
      _
    // Predicated region
    $region14: #{tpu_custom_call.1} parent=1 // pred_check
      _
    $region15: #{tpu_custom_call.1} parent=1 // pred_check_branch
      %56 = sbr.rel (0) target = $region17
    $region16: #{tpu_custom_call.1} parent=1 // pred_region
      %58 = vsyncadd [#allocation9], 0
      %s59 = sshll.u32 %s3, 4
      %s60 = int_to_ptr.hbm [resolvable:$true] %s59
      %s61 = sshll.u32 [#allocation8], 4
      %s62 = int_to_ptr.vmem [resolvable:$true] %s61
      %67 = dma.hbm_to_vmem [thread:$0]  %s60, 8192, %s62, [#allocation9], 1024, 1024, 64
    $region17: #{tpu_custom_call.1} parent=1 // pred_fallthru
      _
    // Predicated region
    $region18: #{tpu_custom_call.1} parent=1 // pred_check
      _
    $region19: #{tpu_custom_call.1} parent=1 // pred_check_branch
      %69 = sbr.rel (0) target = $region21
    $region20: #{tpu_custom_call.1} parent=1 // pred_region
      %71 = vsyncadd [#allocation9], 0
      %s73 = sshll.u32 %s4, 4
      %s74 = int_to_ptr.hbm [resolvable:$true] %s73
      %s75 = sshll.u32 [#allocation10], 4
      %s76 = int_to_ptr.vmem [resolvable:$true] %s75
      %78 = dma.hbm_to_vmem [thread:$0]  %s74, 128, %s76, [#allocation9]
    $region21: #{tpu_custom_call.1} parent=1 // pred_fallthru
      _
    // Predicated region
    $region22: #{tpu_custom_call.1} parent=1 // pred_check
      _
    $region23: #{tpu_custom_call.1} parent=1 // pred_check_branch
      %80 = sbr.rel (0) target = $region25
    $region24: #{tpu_custom_call.1} parent=1 // pred_region
      %82 = vsyncadd [#allocation12], 0
      %s83 = sshll.u32 %s5, 4
      %s84 = int_to_ptr.hbm [resolvable:$true] %s83
      %s85 = sshll.u32 [#allocation11], 4
      %s86 = int_to_ptr.vmem [resolvable:$true] %s85
      %91 = dma.hbm_to_vmem [thread:$0]  %s84, 65536, %s86, [#allocation12], 512, 512, 32
    $region25: #{tpu_custom_call.1} parent=1 // pred_fallthru
      _
    // Predicated region
    $region26: #{tpu_custom_call.1} parent=1 // pred_check
      _
    $region27: #{tpu_custom_call.1} parent=1 // pred_check_branch
      %93 = sbr.rel (0) target = $region29
    $region28: #{tpu_custom_call.1} parent=1 // pred_region
      %95 = vsyncadd [#allocation12], 0
      %s97 = sshll.u32 %s6, 4
      %s98 = int_to_ptr.hbm [resolvable:$true] %s97
      %s99 = sshll.u32 [#allocation13], 4
      %s100 = int_to_ptr.vmem [resolvable:$true] %s99
      %102 = dma.hbm_to_vmem [thread:$0]  %s98, 64, %s100, [#allocation12]
    $region29: #{tpu_custom_call.1} parent=1 // pred_fallthru
      _
    // Predicated region
    $region30: #{tpu_custom_call.1} parent=1 // pred_check
      _
    $region31: #{tpu_custom_call.1} parent=1 // pred_check_branch
      %104 = sbr.rel (0) target = $region33
    $region32: #{tpu_custom_call.1} parent=1 // pred_region
      _
    $region33: #{tpu_custom_call.1} parent=1 // pred_fallthru
      _
    // Predicated region
    $region34: #{tpu_custom_call.1} parent=1 // pred_check
      _
    $region35: #{tpu_custom_call.1} parent=1 // pred_check_branch
      %106 = sbr.rel (0) target = $region37
    $region36: #{tpu_custom_call.1} parent=1 // pred_region
      %108 = vsyncadd [#allocation15], 0
      %s110 = sshll.u32 %s8, 4
      %s111 = int_to_ptr.hbm [resolvable:$true] %s110
      %s112 = sshll.u32 [#allocation14], 4
      %s113 = int_to_ptr.vmem [resolvable:$true] %s112
      %115 = dma.hbm_to_vmem [thread:$0]  %s111, 16, %s113, [#allocation15]
    $region37: #{tpu_custom_call.1} parent=1 // pred_fallthru
      _
    // Predicated region
    $region38: #{tpu_custom_call.1} parent=1 // pred_check
      _
    $region39: #{tpu_custom_call.1} parent=1 // pred_check_branch
      %117 = sbr.rel (0) target = $region41
    $region40: #{tpu_custom_call.1} parent=1 // pred_region
      %119 = dma.done [#allocation3], 128
    $region41: #{tpu_custom_call.1} parent=1 // pred_fallthru
      _
    // Predicated region
    $region42: #{tpu_custom_call.1} parent=1 // pred_check
      _
    $region43: #{tpu_custom_call.1} parent=1 // pred_check_branch
      %121 = sbr.rel (0) target = $region45
    $region44: #{tpu_custom_call.1} parent=1 // pred_region
      %123 = dma.done [#allocation6], 128
    $region45: #{tpu_custom_call.1} parent=1 // pred_fallthru
      _
    // Predicated region
    $region46: #{tpu_custom_call.1} parent=1 // pred_check
      _
    $region47: #{tpu_custom_call.1} parent=1 // pred_check_branch
      %125 = sbr.rel (0) target = $region49
    $region48: #{tpu_custom_call.1} parent=1 // pred_region
      %127 = dma.done [#allocation6], 16384
    $region49: #{tpu_custom_call.1} parent=1 // pred_fallthru
      _
    // Predicated region
    $region50: #{tpu_custom_call.1} parent=1 // pred_check
      _
    $region51: #{tpu_custom_call.1} parent=1 // pred_check_branch
      %129 = sbr.rel (0) target = $region53
    $region52: #{tpu_custom_call.1} parent=1 // pred_region
      %131 = dma.done [#allocation9], 8192
    $region53: #{tpu_custom_call.1} parent=1 // pred_fallthru
      _
    // Predicated region
    $region54: #{tpu_custom_call.1} parent=1 // pred_check
      _
    $region55: #{tpu_custom_call.1} parent=1 // pred_check_branch
      %133 = sbr.rel (0) target = $region57
    $region56: #{tpu_custom_call.1} parent=1 // pred_region
      %135 = dma.done [#allocation9], 128
    $region57: #{tpu_custom_call.1} parent=1 // pred_fallthru
      _
    // Predicated region
    $region58: #{tpu_custom_call.1} parent=1 // pred_check
      _
    $region59: #{tpu_custom_call.1} parent=1 // pred_check_branch
      %137 = sbr.rel (0) target = $region61
    $region60: #{tpu_custom_call.1} parent=1 // pred_region
      %139 = dma.done [#allocation12], 65536
    $region61: #{tpu_custom_call.1} parent=1 // pred_fallthru
      _
    // Predicated region
    $region62: #{tpu_custom_call.1} parent=1 // pred_check
      _
    $region63: #{tpu_custom_call.1} parent=1 // pred_check_branch
      %141 = sbr.rel (0) target = $region65
    $region64: #{tpu_custom_call.1} parent=1 // pred_region
      %143 = dma.done [#allocation12], 64
    $region65: #{tpu_custom_call.1} parent=1 // pred_fallthru
      _
    // Predicated region
    $region66: #{tpu_custom_call.1} parent=1 // pred_check
      _
    $region67: #{tpu_custom_call.1} parent=1 // pred_check_branch
      %145 = sbr.rel (0) target = $region69
    $region68: #{tpu_custom_call.1} parent=1 // pred_region
      %147 = dma.done [#allocation15], 16
    $region69: #{tpu_custom_call.1} parent=1 // pred_fallthru
      _
    %v148 = vld [vmem:[#allocation2] sm:$0xff]
    %v149 = vld [vmem:[#allocation7] sm:$0xff]
    %v150 = vld [vmem:[#allocation7 + $0x8] sm:$0xff]
    %v151 = vld [vmem:[#allocation7 + $0x10] sm:$0xff]
    %v152 = vld [vmem:[#allocation7 + $0x18] sm:$0xff]
    %v153 = vld [vmem:[#allocation7 + $0x20] sm:$0xff]
    %v154 = vld [vmem:[#allocation7 + $0x28] sm:$0xff]
    %v155 = vld [vmem:[#allocation7 + $0x30] sm:$0xff]
    %v156 = vld [vmem:[#allocation7 + $0x38] sm:$0xff]
    %v157 = vld [vmem:[#allocation7 + $0x40] sm:$0xff]
    %v158 = vld [vmem:[#allocation7 + $0x48] sm:$0xff]
    %v159 = vld [vmem:[#allocation7 + $0x50] sm:$0xff]
    %v160 = vld [vmem:[#allocation7 + $0x58] sm:$0xff]
    %v161 = vld [vmem:[#allocation7 + $0x60] sm:$0xff]
    %v162 = vld [vmem:[#allocation7 + $0x68] sm:$0xff]
    %v163 = vld [vmem:[#allocation7 + $0x70] sm:$0xff]
    %v164 = vld [vmem:[#allocation7 + $0x78] sm:$0xff]
    %v165 = vld [vmem:[#allocation7 + $0x80] sm:$0xff]
    %v166 = vld [vmem:[#allocation7 + $0x88] sm:$0xff]
    %v167 = vld [vmem:[#allocation7 + $0x90] sm:$0xff]
    %v168 = vld [vmem:[#allocation7 + $0x98] sm:$0xff]
    %v169 = vld [vmem:[#allocation7 + $0xa0] sm:$0xff]
    %v170 = vld [vmem:[#allocation7 + $0xa8] sm:$0xff]
    %v171 = vld [vmem:[#allocation7 + $0xb0] sm:$0xff]
    %v172 = vld [vmem:[#allocation7 + $0xb8] sm:$0xff]
    %v173 = vld [vmem:[#allocation7 + $0xc0] sm:$0xff]
    %v174 = vld [vmem:[#allocation7 + $0xc8] sm:$0xff]
    %v175 = vld [vmem:[#allocation7 + $0xd0] sm:$0xff]
    %v176 = vld [vmem:[#allocation7 + $0xd8] sm:$0xff]
    %v177 = vld [vmem:[#allocation7 + $0xe0] sm:$0xff]
    %v178 = vld [vmem:[#allocation7 + $0xe8] sm:$0xff]
    %v179 = vld [vmem:[#allocation7 + $0xf0] sm:$0xff]
    %v180 = vld [vmem:[#allocation7 + $0xf8] sm:$0xff]
    %v181 = vld [vmem:[#allocation7 + $0x100] sm:$0xff]
    %v182 = vld [vmem:[#allocation7 + $0x108] sm:$0xff]
    %v183 = vld [vmem:[#allocation7 + $0x110] sm:$0xff]
    %v184 = vld [vmem:[#allocation7 + $0x118] sm:$0xff]
    %v185 = vld [vmem:[#allocation7 + $0x120] sm:$0xff]
    %v186 = vld [vmem:[#allocation7 + $0x128] sm:$0xff]
    %v187 = vld [vmem:[#allocation7 + $0x130] sm:$0xff]
    %v188 = vld [vmem:[#allocation7 + $0x138] sm:$0xff]
    %v189 = vld [vmem:[#allocation7 + $0x140] sm:$0xff]
    %v190 = vld [vmem:[#allocation7 + $0x148] sm:$0xff]
    %v191 = vld [vmem:[#allocation7 + $0x150] sm:$0xff]
    %v192 = vld [vmem:[#allocation7 + $0x158] sm:$0xff]
    %v193 = vld [vmem:[#allocation7 + $0x160] sm:$0xff]
    %v194 = vld [vmem:[#allocation7 + $0x168] sm:$0xff]
    %v195 = vld [vmem:[#allocation7 + $0x170] sm:$0xff]
    %v196 = vld [vmem:[#allocation7 + $0x178] sm:$0xff]
    %v197 = vld [vmem:[#allocation7 + $0x180] sm:$0xff]
    %v198 = vld [vmem:[#allocation7 + $0x188] sm:$0xff]
    %v199 = vld [vmem:[#allocation7 + $0x190] sm:$0xff]
    %v200 = vld [vmem:[#allocation7 + $0x198] sm:$0xff]
    %v201 = vld [vmem:[#allocation7 + $0x1a0] sm:$0xff]
    %v202 = vld [vmem:[#allocation7 + $0x1a8] sm:$0xff]
    %v203 = vld [vmem:[#allocation7 + $0x1b0] sm:$0xff]
    %v204 = vld [vmem:[#allocation7 + $0x1b8] sm:$0xff]
    %v205 = vld [vmem:[#allocation7 + $0x1c0] sm:$0xff]
    %v206 = vld [vmem:[#allocation7 + $0x1c8] sm:$0xff]
    %v207 = vld [vmem:[#allocation7 + $0x1d0] sm:$0xff]
    %v208 = vld [vmem:[#allocation7 + $0x1d8] sm:$0xff]
    %v209 = vld [vmem:[#allocation7 + $0x1e0] sm:$0xff]
    %v210 = vld [vmem:[#allocation7 + $0x1e8] sm:$0xff]
    %v211 = vld [vmem:[#allocation7 + $0x1f0] sm:$0xff]
    %v212 = vld [vmem:[#allocation7 + $0x1f8] sm:$0xff]
    %v213 = vld [vmem:[#allocation7 + $0x200] sm:$0xff]
    %v214 = vld [vmem:[#allocation7 + $0x208] sm:$0xff]
    %v215 = vld [vmem:[#allocation7 + $0x210] sm:$0xff]
    %v216 = vld [vmem:[#allocation7 + $0x218] sm:$0xff]
    %v217 = vld [vmem:[#allocation7 + $0x220] sm:$0xff]
    %v218 = vld [vmem:[#allocation7 + $0x228] sm:$0xff]
    %v219 = vld [vmem:[#allocation7 + $0x230] sm:$0xff]
    %v220 = vld [vmem:[#allocation7 + $0x238] sm:$0xff]
    %v221 = vld [vmem:[#allocation7 + $0x240] sm:$0xff]
    %v222 = vld [vmem:[#allocation7 + $0x248] sm:$0xff]
    %v223 = vld [vmem:[#allocation7 + $0x250] sm:$0xff]
    %v224 = vld [vmem:[#allocation7 + $0x258] sm:$0xff]
    %v225 = vld [vmem:[#allocation7 + $0x260] sm:$0xff]
    %v226 = vld [vmem:[#allocation7 + $0x268] sm:$0xff]
    %v227 = vld [vmem:[#allocation7 + $0x270] sm:$0xff]
    %v228 = vld [vmem:[#allocation7 + $0x278] sm:$0xff]
    %v229 = vld [vmem:[#allocation7 + $0x280] sm:$0xff]
    %v230 = vld [vmem:[#allocation7 + $0x288] sm:$0xff]
    %v231 = vld [vmem:[#allocation7 + $0x290] sm:$0xff]
    %v232 = vld [vmem:[#allocation7 + $0x298] sm:$0xff]
    %v233 = vld [vmem:[#allocation7 + $0x2a0] sm:$0xff]
    %v234 = vld [vmem:[#allocation7 + $0x2a8] sm:$0xff]
    %v235 = vld [vmem:[#allocation7 + $0x2b0] sm:$0xff]
    %v236 = vld [vmem:[#allocation7 + $0x2b8] sm:$0xff]
    %v237 = vld [vmem:[#allocation7 + $0x2c0] sm:$0xff]
    %v238 = vld [vmem:[#allocation7 + $0x2c8] sm:$0xff]
    %v239 = vld [vmem:[#allocation7 + $0x2d0] sm:$0xff]
    %v240 = vld [vmem:[#allocation7 + $0x2d8] sm:$0xff]
    %v241 = vld [vmem:[#allocation7 + $0x2e0] sm:$0xff]
    %v242 = vld [vmem:[#allocation7 + $0x2e8] sm:$0xff]
    %v243 = vld [vmem:[#allocation7 + $0x2f0] sm:$0xff]
    %v244 = vld [vmem:[#allocation7 + $0x2f8] sm:$0xff]
    %v245 = vld [vmem:[#allocation7 + $0x300] sm:$0xff]
    %v246 = vld [vmem:[#allocation7 + $0x308] sm:$0xff]
    %v247 = vld [vmem:[#allocation7 + $0x310] sm:$0xff]
    %v248 = vld [vmem:[#allocation7 + $0x318] sm:$0xff]
    %v249 = vld [vmem:[#allocation7 + $0x320] sm:$0xff]
    %v250 = vld [vmem:[#allocation7 + $0x328] sm:$0xff]
    %v251 = vld [vmem:[#allocation7 + $0x330] sm:$0xff]
    %v252 = vld [vmem:[#allocation7 + $0x338] sm:$0xff]
    %v253 = vld [vmem:[#allocation7 + $0x340] sm:$0xff]
    %v254 = vld [vmem:[#allocation7 + $0x348] sm:$0xff]
    %v255 = vld [vmem:[#allocation7 + $0x350] sm:$0xff]
    %v256 = vld [vmem:[#allocation7 + $0x358] sm:$0xff]
    %v257 = vld [vmem:[#allocation7 + $0x360] sm:$0xff]
    %v258 = vld [vmem:[#allocation7 + $0x368] sm:$0xff]
    %v259 = vld [vmem:[#allocation7 + $0x370] sm:$0xff]
    %v260 = vld [vmem:[#allocation7 + $0x378] sm:$0xff]
    %v261 = vld [vmem:[#allocation7 + $0x380] sm:$0xff]
    %v262 = vld [vmem:[#allocation7 + $0x388] sm:$0xff]
    %v263 = vld [vmem:[#allocation7 + $0x390] sm:$0xff]
    %v264 = vld [vmem:[#allocation7 + $0x398] sm:$0xff]
    %v265 = vld [vmem:[#allocation7 + $0x3a0] sm:$0xff]
    %v266 = vld [vmem:[#allocation7 + $0x3a8] sm:$0xff]
    %v267 = vld [vmem:[#allocation7 + $0x3b0] sm:$0xff]
    %v268 = vld [vmem:[#allocation7 + $0x3b8] sm:$0xff]
    %v269 = vld [vmem:[#allocation7 + $0x3c0] sm:$0xff]
    %v270 = vld [vmem:[#allocation7 + $0x3c8] sm:$0xff]
    %v271 = vld [vmem:[#allocation7 + $0x3d0] sm:$0xff]
    %v272 = vld [vmem:[#allocation7 + $0x3d8] sm:$0xff]
    %v273 = vld [vmem:[#allocation7 + $0x3e0] sm:$0xff]
    %v274 = vld [vmem:[#allocation7 + $0x3e8] sm:$0xff]
    %v275 = vld [vmem:[#allocation7 + $0x3f0] sm:$0xff]
    %v276 = vld [vmem:[#allocation7 + $0x3f8] sm:$0xff]
    %v277 = vld [vmem:[#allocation5] sm:$0xff]
    %v278 = vld [vmem:[#allocation8] sm:$0xff]
    %v279 = vld [vmem:[#allocation8 + $0x8] sm:$0xff]
    %v280 = vld [vmem:[#allocation8 + $0x10] sm:$0xff]
    %v281 = vld [vmem:[#allocation8 + $0x18] sm:$0xff]
    %v282 = vld [vmem:[#allocation8 + $0x20] sm:$0xff]
    %v283 = vld [vmem:[#allocation8 + $0x28] sm:$0xff]
    %v284 = vld [vmem:[#allocation8 + $0x30] sm:$0xff]
    %v285 = vld [vmem:[#allocation8 + $0x38] sm:$0xff]
    %v286 = vld [vmem:[#allocation8 + $0x40] sm:$0xff]
    %v287 = vld [vmem:[#allocation8 + $0x48] sm:$0xff]
    %v288 = vld [vmem:[#allocation8 + $0x50] sm:$0xff]
    %v289 = vld [vmem:[#allocation8 + $0x58] sm:$0xff]
    %v290 = vld [vmem:[#allocation8 + $0x60] sm:$0xff]
    %v291 = vld [vmem:[#allocation8 + $0x68] sm:$0xff]
    %v292 = vld [vmem:[#allocation8 + $0x70] sm:$0xff]
    %v293 = vld [vmem:[#allocation8 + $0x78] sm:$0xff]
    %v294 = vld [vmem:[#allocation8 + $0x80] sm:$0xff]
    %v295 = vld [vmem:[#allocation8 + $0x88] sm:$0xff]
    %v296 = vld [vmem:[#allocation8 + $0x90] sm:$0xff]
    %v297 = vld [vmem:[#allocation8 + $0x98] sm:$0xff]
    %v298 = vld [vmem:[#allocation8 + $0xa0] sm:$0xff]
    %v299 = vld [vmem:[#allocation8 + $0xa8] sm:$0xff]
    %v300 = vld [vmem:[#allocation8 + $0xb0] sm:$0xff]
    %v301 = vld [vmem:[#allocation8 + $0xb8] sm:$0xff]
    %v302 = vld [vmem:[#allocation8 + $0xc0] sm:$0xff]
    %v303 = vld [vmem:[#allocation8 + $0xc8] sm:$0xff]
    %v304 = vld [vmem:[#allocation8 + $0xd0] sm:$0xff]
    %v305 = vld [vmem:[#allocation8 + $0xd8] sm:$0xff]
    %v306 = vld [vmem:[#allocation8 + $0xe0] sm:$0xff]
    %v307 = vld [vmem:[#allocation8 + $0xe8] sm:$0xff]
    %v308 = vld [vmem:[#allocation8 + $0xf0] sm:$0xff]
    %v309 = vld [vmem:[#allocation8 + $0xf8] sm:$0xff]
    %v310 = vld [vmem:[#allocation8 + $0x100] sm:$0xff]
    %v311 = vld [vmem:[#allocation8 + $0x108] sm:$0xff]
    %v312 = vld [vmem:[#allocation8 + $0x110] sm:$0xff]
    %v313 = vld [vmem:[#allocation8 + $0x118] sm:$0xff]
    %v314 = vld [vmem:[#allocation8 + $0x120] sm:$0xff]
    %v315 = vld [vmem:[#allocation8 + $0x128] sm:$0xff]
    %v316 = vld [vmem:[#allocation8 + $0x130] sm:$0xff]
    %v317 = vld [vmem:[#allocation8 + $0x138] sm:$0xff]
    %v318 = vld [vmem:[#allocation8 + $0x140] sm:$0xff]
    %v319 = vld [vmem:[#allocation8 + $0x148] sm:$0xff]
    %v320 = vld [vmem:[#allocation8 + $0x150] sm:$0xff]
    %v321 = vld [vmem:[#allocation8 + $0x158] sm:$0xff]
    %v322 = vld [vmem:[#allocation8 + $0x160] sm:$0xff]
    %v323 = vld [vmem:[#allocation8 + $0x168] sm:$0xff]
    %v324 = vld [vmem:[#allocation8 + $0x170] sm:$0xff]
    %v325 = vld [vmem:[#allocation8 + $0x178] sm:$0xff]
    %v326 = vld [vmem:[#allocation8 + $0x180] sm:$0xff]
    %v327 = vld [vmem:[#allocation8 + $0x188] sm:$0xff]
    %v328 = vld [vmem:[#allocation8 + $0x190] sm:$0xff]
    %v329 = vld [vmem:[#allocation8 + $0x198] sm:$0xff]
    %v330 = vld [vmem:[#allocation8 + $0x1a0] sm:$0xff]
    %v331 = vld [vmem:[#allocation8 + $0x1a8] sm:$0xff]
    %v332 = vld [vmem:[#allocation8 + $0x1b0] sm:$0xff]
    %v333 = vld [vmem:[#allocation8 + $0x1b8] sm:$0xff]
    %v334 = vld [vmem:[#allocation8 + $0x1c0] sm:$0xff]
    %v335 = vld [vmem:[#allocation8 + $0x1c8] sm:$0xff]
    %v336 = vld [vmem:[#allocation8 + $0x1d0] sm:$0xff]
    %v337 = vld [vmem:[#allocation8 + $0x1d8] sm:$0xff]
    %v338 = vld [vmem:[#allocation8 + $0x1e0] sm:$0xff]
    %v339 = vld [vmem:[#allocation8 + $0x1e8] sm:$0xff]
    %v340 = vld [vmem:[#allocation8 + $0x1f0] sm:$0xff]
    %v341 = vld [vmem:[#allocation8 + $0x1f8] sm:$0xff]
    %vm342 = vcmask 523264
    %v344 = vsel %vm342, %v277, 0
    %346 = vmatpush.msra.mxu0 0.0
    %347 = vmatpush.msra.mxu0 0.0
    %348 = vmatpush.msra.mxu0 0.0
    %349 = vmatpush.msra.mxu0 0.0
    %350 = vmatpush.msra.mxu0 0.0
    %351 = vmatpush.msra.mxu0 0.0
    %352 = vmatpush.msra.mxu0 0.0
    %353 = vmatpush.msra.mxu0 0.0
    %354 = vmatpush.msra.mxu0 %v334
    %355 = vmatpush.msra.mxu0 %v326
    %356 = vmatpush.msra.mxu0 %v318
    %357 = vmatpush.msra.mxu0 %v310
    %358 = vmatpush.msra.mxu0 %v302
    %359 = vmatpush.msra.mxu0 %v294
    %360 = vmatpush.msra.mxu0 %v286
    %361 = vmatpush.msra.mxu0 %v278
    %362 = vmatmul.f32.gmra.mxu0 %v344
    %v363 = vpop.f32.mrf.mxu0
    %v364 = vadd.f32 0.0, %v363
    %365 = vdwg.mxu0
    %366 = vmatpush.msra.mxu0 0.0
    %367 = vmatpush.msra.mxu0 0.0
    %368 = vmatpush.msra.mxu0 0.0
    %369 = vmatpush.msra.mxu0 0.0
    %370 = vmatpush.msra.mxu0 0.0
    %371 = vmatpush.msra.mxu0 0.0
    %372 = vmatpush.msra.mxu0 0.0
    %373 = vmatpush.msra.mxu0 0.0
    %374 = vmatpush.msra.mxu0 %v335
    %375 = vmatpush.msra.mxu0 %v327
    %376 = vmatpush.msra.mxu0 %v319
    %377 = vmatpush.msra.mxu0 %v311
    %378 = vmatpush.msra.mxu0 %v303
    %379 = vmatpush.msra.mxu0 %v295
    %380 = vmatpush.msra.mxu0 %v287
    %381 = vmatpush.msra.mxu0 %v279
    %382 = vmatmul.f32.gmra.mxu0 %v344
    %v383 = vpop.f32.mrf.mxu0
    %v384 = vadd.f32 0.0, %v383
    %385 = vdwg.mxu0
    %386 = vmatpush.msra.mxu0 0.0
    %387 = vmatpush.msra.mxu0 0.0
    %388 = vmatpush.msra.mxu0 0.0
    %389 = vmatpush.msra.mxu0 0.0
    %390 = vmatpush.msra.mxu0 0.0
    %391 = vmatpush.msra.mxu0 0.0
    %392 = vmatpush.msra.mxu0 0.0
    %393 = vmatpush.msra.mxu0 0.0
    %394 = vmatpush.msra.mxu0 %v336
    %395 = vmatpush.msra.mxu0 %v328
    %396 = vmatpush.msra.mxu0 %v320
    %397 = vmatpush.msra.mxu0 %v312
    %398 = vmatpush.msra.mxu0 %v304
    %399 = vmatpush.msra.mxu0 %v296
    %400 = vmatpush.msra.mxu0 %v288
    %401 = vmatpush.msra.mxu0 %v280
    %402 = vmatmul.f32.gmra.mxu0 %v344
    %v403 = vpop.f32.mrf.mxu0
    %v404 = vadd.f32 0.0, %v403
    %405 = vdwg.mxu0
    %406 = vmatpush.msra.mxu0 0.0
    %407 = vmatpush.msra.mxu0 0.0
    %408 = vmatpush.msra.mxu0 0.0
    %409 = vmatpush.msra.mxu0 0.0
    %410 = vmatpush.msra.mxu0 0.0
    %411 = vmatpush.msra.mxu0 0.0
    %412 = vmatpush.msra.mxu0 0.0
    %413 = vmatpush.msra.mxu0 0.0
    %414 = vmatpush.msra.mxu0 %v337
    %415 = vmatpush.msra.mxu0 %v329
    %416 = vmatpush.msra.mxu0 %v321
    %417 = vmatpush.msra.mxu0 %v313
    %418 = vmatpush.msra.mxu0 %v305
    %419 = vmatpush.msra.mxu0 %v297
    %420 = vmatpush.msra.mxu0 %v289
    %421 = vmatpush.msra.mxu0 %v281
    %422 = vmatmul.f32.gmra.mxu0 %v344
    %v423 = vpop.f32.mrf.mxu0
    %v424 = vadd.f32 0.0, %v423
    %425 = vdwg.mxu0
    %426 = vmatpush.msra.mxu0 0.0
    %427 = vmatpush.msra.mxu0 0.0
    %428 = vmatpush.msra.mxu0 0.0
    %429 = vmatpush.msra.mxu0 0.0
    %430 = vmatpush.msra.mxu0 0.0
    %431 = vmatpush.msra.mxu0 0.0
    %432 = vmatpush.msra.mxu0 0.0
    %433 = vmatpush.msra.mxu0 0.0
    %434 = vmatpush.msra.mxu0 %v338
    %435 = vmatpush.msra.mxu0 %v330
    %436 = vmatpush.msra.mxu0 %v322
    %437 = vmatpush.msra.mxu0 %v314
    %438 = vmatpush.msra.mxu0 %v306
    %439 = vmatpush.msra.mxu0 %v298
    %440 = vmatpush.msra.mxu0 %v290
    %441 = vmatpush.msra.mxu0 %v282
    %442 = vmatmul.f32.gmra.mxu0 %v344
    %v443 = vpop.f32.mrf.mxu0
    %v444 = vadd.f32 0.0, %v443
    %445 = vdwg.mxu0
    %446 = vmatpush.msra.mxu0 0.0
    %447 = vmatpush.msra.mxu0 0.0
    %448 = vmatpush.msra.mxu0 0.0
    %449 = vmatpush.msra.mxu0 0.0
    %450 = vmatpush.msra.mxu0 0.0
    %451 = vmatpush.msra.mxu0 0.0
    %452 = vmatpush.msra.mxu0 0.0
    %453 = vmatpush.msra.mxu0 0.0
    %454 = vmatpush.msra.mxu0 %v339
    %455 = vmatpush.msra.mxu0 %v331
    %456 = vmatpush.msra.mxu0 %v323
    %457 = vmatpush.msra.mxu0 %v315
    %458 = vmatpush.msra.mxu0 %v307
    %459 = vmatpush.msra.mxu0 %v299
    %460 = vmatpush.msra.mxu0 %v291
    %461 = vmatpush.msra.mxu0 %v283
    %462 = vmatmul.f32.gmra.mxu0 %v344
    %v463 = vpop.f32.mrf.mxu0
    %v464 = vadd.f32 0.0, %v463
    %465 = vdwg.mxu0
    %466 = vmatpush.msra.mxu0 0.0
    %467 = vmatpush.msra.mxu0 0.0
    %468 = vmatpush.msra.mxu0 0.0
    %469 = vmatpush.msra.mxu0 0.0
    %470 = vmatpush.msra.mxu0 0.0
    %471 = vmatpush.msra.mxu0 0.0
    %472 = vmatpush.msra.mxu0 0.0
    %473 = vmatpush.msra.mxu0 0.0
    %474 = vmatpush.msra.mxu0 %v340
    %475 = vmatpush.msra.mxu0 %v332
    %476 = vmatpush.msra.mxu0 %v324
    %477 = vmatpush.msra.mxu0 %v316
    %478 = vmatpush.msra.mxu0 %v308
    %479 = vmatpush.msra.mxu0 %v300
    %480 = vmatpush.msra.mxu0 %v292
    %481 = vmatpush.msra.mxu0 %v284
    %482 = vmatmul.f32.gmra.mxu0 %v344
    %v483 = vpop.f32.mrf.mxu0
    %v484 = vadd.f32 0.0, %v483
    %485 = vdwg.mxu0
    %486 = vmatpush.msra.mxu0 0.0
    %487 = vmatpush.msra.mxu0 0.0
    %488 = vmatpush.msra.mxu0 0.0
    %489 = vmatpush.msra.mxu0 0.0
    %490 = vmatpush.msra.mxu0 0.0
    %491 = vmatpush.msra.mxu0 0.0
    %492 = vmatpush.msra.mxu0 0.0
    %493 = vmatpush.msra.mxu0 0.0
    %494 = vmatpush.msra.mxu0 %v341
    %495 = vmatpush.msra.mxu0 %v333
    %496 = vmatpush.msra.mxu0 %v325
    %497 = vmatpush.msra.mxu0 %v317
    %498 = vmatpush.msra.mxu0 %v309
    %499 = vmatpush.msra.mxu0 %v301
    %500 = vmatpush.msra.mxu0 %v293
    %501 = vmatpush.msra.mxu0 %v285
    %502 = vmatmul.f32.gmra.mxu0 %v344
    %v503 = vpop.f32.mrf.mxu0
    %v504 = vadd.f32 0.0, %v503
    %505 = vdwg.mxu0
    %506 = vmatpush.msra.mxu0 %v269
    %507 = vmatpush.msra.mxu0 %v261
    %508 = vmatpush.msra.mxu0 %v253
    %509 = vmatpush.msra.mxu0 %v245
    %510 = vmatpush.msra.mxu0 %v237
    %511 = vmatpush.msra.mxu0 %v229
    %512 = vmatpush.msra.mxu0 %v221
    %513 = vmatpush.msra.mxu0 %v213
    %514 = vmatpush.msra.mxu0 %v205
    %515 = vmatpush.msra.mxu0 %v197
    %516 = vmatpush.msra.mxu0 %v189
    %517 = vmatpush.msra.mxu0 %v181
    %518 = vmatpush.msra.mxu0 %v173
    %519 = vmatpush.msra.mxu0 %v165
    %520 = vmatpush.msra.mxu0 %v157
    %521 = vmatpush.msra.mxu0 %v149
    %522 = vmatmul.f32.gmra.mxu0 %v148
    %v523 = vpop.f32.mrf.mxu0
    %v524 = vadd.f32 %v364, %v523
    %525 = vdwg.mxu0
    %526 = vmatpush.msra.mxu0 %v270
    %527 = vmatpush.msra.mxu0 %v262
    %528 = vmatpush.msra.mxu0 %v254
    %529 = vmatpush.msra.mxu0 %v246
    %530 = vmatpush.msra.mxu0 %v238
    %531 = vmatpush.msra.mxu0 %v230
    %532 = vmatpush.msra.mxu0 %v222
    %533 = vmatpush.msra.mxu0 %v214
    %534 = vmatpush.msra.mxu0 %v206
    %535 = vmatpush.msra.mxu0 %v198
    %536 = vmatpush.msra.mxu0 %v190
    %537 = vmatpush.msra.mxu0 %v182
    %538 = vmatpush.msra.mxu0 %v174
    %539 = vmatpush.msra.mxu0 %v166
    %540 = vmatpush.msra.mxu0 %v158
    %541 = vmatpush.msra.mxu0 %v150
    %542 = vmatmul.f32.gmra.mxu0 %v148
    %v543 = vpop.f32.mrf.mxu0
    %v544 = vadd.f32 %v384, %v543
    %545 = vdwg.mxu0
    %546 = vmatpush.msra.mxu0 %v271
    %547 = vmatpush.msra.mxu0 %v263
    %548 = vmatpush.msra.mxu0 %v255
    %549 = vmatpush.msra.mxu0 %v247
    %550 = vmatpush.msra.mxu0 %v239
    %551 = vmatpush.msra.mxu0 %v231
    %552 = vmatpush.msra.mxu0 %v223
    %553 = vmatpush.msra.mxu0 %v215
    %554 = vmatpush.msra.mxu0 %v207
    %555 = vmatpush.msra.mxu0 %v199
    %556 = vmatpush.msra.mxu0 %v191
    %557 = vmatpush.msra.mxu0 %v183
    %558 = vmatpush.msra.mxu0 %v175
    %559 = vmatpush.msra.mxu0 %v167
    %560 = vmatpush.msra.mxu0 %v159
    %561 = vmatpush.msra.mxu0 %v151
    %562 = vmatmul.f32.gmra.mxu0 %v148
    %v563 = vpop.f32.mrf.mxu0
    %v564 = vadd.f32 %v404, %v563
    %565 = vdwg.mxu0
    %566 = vmatpush.msra.mxu0 %v272
    %567 = vmatpush.msra.mxu0 %v264
    %568 = vmatpush.msra.mxu0 %v256
    %569 = vmatpush.msra.mxu0 %v248
    %570 = vmatpush.msra.mxu0 %v240
    %571 = vmatpush.msra.mxu0 %v232
    %572 = vmatpush.msra.mxu0 %v224
    %573 = vmatpush.msra.mxu0 %v216
    %574 = vmatpush.msra.mxu0 %v208
    %575 = vmatpush.msra.mxu0 %v200
    %576 = vmatpush.msra.mxu0 %v192
    %577 = vmatpush.msra.mxu0 %v184
    %578 = vmatpush.msra.mxu0 %v176
    %579 = vmatpush.msra.mxu0 %v168
    %580 = vmatpush.msra.mxu0 %v160
    %581 = vmatpush.msra.mxu0 %v152
    %582 = vmatmul.f32.gmra.mxu0 %v148
    %v583 = vpop.f32.mrf.mxu0
    %v584 = vadd.f32 %v424, %v583
    %585 = vdwg.mxu0
    %586 = vmatpush.msra.mxu0 %v273
    %587 = vmatpush.msra.mxu0 %v265
    %588 = vmatpush.msra.mxu0 %v257
    %589 = vmatpush.msra.mxu0 %v249
    %590 = vmatpush.msra.mxu0 %v241
    %591 = vmatpush.msra.mxu0 %v233
    %592 = vmatpush.msra.mxu0 %v225
    %593 = vmatpush.msra.mxu0 %v217
    %594 = vmatpush.msra.mxu0 %v209
    %595 = vmatpush.msra.mxu0 %v201
    %596 = vmatpush.msra.mxu0 %v193
    %597 = vmatpush.msra.mxu0 %v185
    %598 = vmatpush.msra.mxu0 %v177
    %599 = vmatpush.msra.mxu0 %v169
    %600 = vmatpush.msra.mxu0 %v161
    %601 = vmatpush.msra.mxu0 %v153
    %602 = vmatmul.f32.gmra.mxu0 %v148
    %v603 = vpop.f32.mrf.mxu0
    %v604 = vadd.f32 %v444, %v603
    %605 = vdwg.mxu0
    %606 = vmatpush.msra.mxu0 %v274
    %607 = vmatpush.msra.mxu0 %v266
    %608 = vmatpush.msra.mxu0 %v258
    %609 = vmatpush.msra.mxu0 %v250
    %610 = vmatpush.msra.mxu0 %v242
    %611 = vmatpush.msra.mxu0 %v234
    %612 = vmatpush.msra.mxu0 %v226
    %613 = vmatpush.msra.mxu0 %v218
    %614 = vmatpush.msra.mxu0 %v210
    %615 = vmatpush.msra.mxu0 %v202
    %616 = vmatpush.msra.mxu0 %v194
    %617 = vmatpush.msra.mxu0 %v186
    %618 = vmatpush.msra.mxu0 %v178
    %619 = vmatpush.msra.mxu0 %v170
    %620 = vmatpush.msra.mxu0 %v162
    %621 = vmatpush.msra.mxu0 %v154
    %622 = vmatmul.f32.gmra.mxu0 %v148
    %v623 = vpop.f32.mrf.mxu0
    %v624 = vadd.f32 %v464, %v623
    %625 = vdwg.mxu0
    %626 = vmatpush.msra.mxu0 %v275
    %627 = vmatpush.msra.mxu0 %v267
    %628 = vmatpush.msra.mxu0 %v259
    %629 = vmatpush.msra.mxu0 %v251
    %630 = vmatpush.msra.mxu0 %v243
    %631 = vmatpush.msra.mxu0 %v235
    %632 = vmatpush.msra.mxu0 %v227
    %633 = vmatpush.msra.mxu0 %v219
    %634 = vmatpush.msra.mxu0 %v211
    %635 = vmatpush.msra.mxu0 %v203
    %636 = vmatpush.msra.mxu0 %v195
    %637 = vmatpush.msra.mxu0 %v187
    %638 = vmatpush.msra.mxu0 %v179
    %639 = vmatpush.msra.mxu0 %v171
    %640 = vmatpush.msra.mxu0 %v163
    %641 = vmatpush.msra.mxu0 %v155
    %642 = vmatmul.f32.gmra.mxu0 %v148
    %v643 = vpop.f32.mrf.mxu0
    %v644 = vadd.f32 %v484, %v643
    %645 = vdwg.mxu0
    %646 = vmatpush.msra.mxu0 %v276
    %647 = vmatpush.msra.mxu0 %v268
    %648 = vmatpush.msra.mxu0 %v260
    %649 = vmatpush.msra.mxu0 %v252
    %650 = vmatpush.msra.mxu0 %v244
    %651 = vmatpush.msra.mxu0 %v236
    %652 = vmatpush.msra.mxu0 %v228
    %653 = vmatpush.msra.mxu0 %v220
    %654 = vmatpush.msra.mxu0 %v212
    %655 = vmatpush.msra.mxu0 %v204
    %656 = vmatpush.msra.mxu0 %v196
    %657 = vmatpush.msra.mxu0 %v188
    %658 = vmatpush.msra.mxu0 %v180
    %659 = vmatpush.msra.mxu0 %v172
    %660 = vmatpush.msra.mxu0 %v164
    %661 = vmatpush.msra.mxu0 %v156
    %662 = vmatmul.f32.gmra.mxu0 %v148
    %v663 = vpop.f32.mrf.mxu0
    %v664 = vadd.f32 %v504, %v663
    %665 = vdwg.mxu0
    %v666 = vld [vmem:[#allocation10] sm:$0xff]
    %v668 = vperm.slane %v666, 0
    %v669 = vperm.slane %v666, 1
    %v670 = vperm.slane %v666, 2
    %v671 = vperm.slane %v666, 3
    %v672 = vperm.slane %v666, 4
    %v673 = vperm.slane %v666, 5
    %v674 = vperm.slane %v666, 6
    %v675 = vperm.slane %v666, 7
    %v684 = vadd.f32 %v524, %v668
    %v685 = vadd.f32 %v544, %v669
    %v686 = vadd.f32 %v564, %v670
    %v687 = vadd.f32 %v584, %v671
    %v688 = vadd.f32 %v604, %v672
    %v689 = vadd.f32 %v624, %v673
    %v690 = vadd.f32 %v644, %v674
    %v691 = vadd.f32 %v664, %v675
    %v692 = vmax.f32 %v684, 0.0
    %v693 = vmax.f32 %v685, 0.0
    %v694 = vmax.f32 %v686, 0.0
    %v695 = vmax.f32 %v687, 0.0
    %v696 = vmax.f32 %v688, 0.0
    %v697 = vmax.f32 %v689, 0.0
    %v698 = vmax.f32 %v690, 0.0
    %v699 = vmax.f32 %v691, 0.0
    %v700 = vld [vmem:[#allocation11] sm:$0xff]
    %v701 = vld [vmem:[#allocation11 + $0x8] sm:$0xff]
    %v702 = vld [vmem:[#allocation11 + $0x10] sm:$0xff]
    %v703 = vld [vmem:[#allocation11 + $0x18] sm:$0xff]
    %v704 = vld [vmem:[#allocation11 + $0x20] sm:$0xff]
    %v705 = vld [vmem:[#allocation11 + $0x28] sm:$0xff]
    %v706 = vld [vmem:[#allocation11 + $0x30] sm:$0xff]
    %v707 = vld [vmem:[#allocation11 + $0x38] sm:$0xff]
    %v708 = vld [vmem:[#allocation11 + $0x40] sm:$0xff]
    %v709 = vld [vmem:[#allocation11 + $0x48] sm:$0xff]
    %v710 = vld [vmem:[#allocation11 + $0x50] sm:$0xff]
    %v711 = vld [vmem:[#allocation11 + $0x58] sm:$0xff]
    %v712 = vld [vmem:[#allocation11 + $0x60] sm:$0xff]
    %v713 = vld [vmem:[#allocation11 + $0x68] sm:$0xff]
    %v714 = vld [vmem:[#allocation11 + $0x70] sm:$0xff]
    %v715 = vld [vmem:[#allocation11 + $0x78] sm:$0xff]
    %v716 = vld [vmem:[#allocation11 + $0x80] sm:$0xff]
    %v717 = vld [vmem:[#allocation11 + $0x88] sm:$0xff]
    %v718 = vld [vmem:[#allocation11 + $0x90] sm:$0xff]
    %v719 = vld [vmem:[#allocation11 + $0x98] sm:$0xff]
    %v720 = vld [vmem:[#allocation11 + $0xa0] sm:$0xff]
    %v721 = vld [vmem:[#allocation11 + $0xa8] sm:$0xff]
    %v722 = vld [vmem:[#allocation11 + $0xb0] sm:$0xff]
    %v723 = vld [vmem:[#allocation11 + $0xb8] sm:$0xff]
    %v724 = vld [vmem:[#allocation11 + $0xc0] sm:$0xff]
    %v725 = vld [vmem:[#allocation11 + $0xc8] sm:$0xff]
    %v726 = vld [vmem:[#allocation11 + $0xd0] sm:$0xff]
    %v727 = vld [vmem:[#allocation11 + $0xd8] sm:$0xff]
    %v728 = vld [vmem:[#allocation11 + $0xe0] sm:$0xff]
    %v729 = vld [vmem:[#allocation11 + $0xe8] sm:$0xff]
    %v730 = vld [vmem:[#allocation11 + $0xf0] sm:$0xff]
    %v731 = vld [vmem:[#allocation11 + $0xf8] sm:$0xff]
    %v732 = vld [vmem:[#allocation11 + $0x100] sm:$0xff]
    %v733 = vld [vmem:[#allocation11 + $0x108] sm:$0xff]
    %v734 = vld [vmem:[#allocation11 + $0x110] sm:$0xff]
    %v735 = vld [vmem:[#allocation11 + $0x118] sm:$0xff]
    %v736 = vld [vmem:[#allocation11 + $0x120] sm:$0xff]
    %v737 = vld [vmem:[#allocation11 + $0x128] sm:$0xff]
    %v738 = vld [vmem:[#allocation11 + $0x130] sm:$0xff]
    %v739 = vld [vmem:[#allocation11 + $0x138] sm:$0xff]
    %v740 = vld [vmem:[#allocation11 + $0x140] sm:$0xff]
    %v741 = vld [vmem:[#allocation11 + $0x148] sm:$0xff]
    %v742 = vld [vmem:[#allocation11 + $0x150] sm:$0xff]
    %v743 = vld [vmem:[#allocation11 + $0x158] sm:$0xff]
    %v744 = vld [vmem:[#allocation11 + $0x160] sm:$0xff]
    %v745 = vld [vmem:[#allocation11 + $0x168] sm:$0xff]
    %v746 = vld [vmem:[#allocation11 + $0x170] sm:$0xff]
    %v747 = vld [vmem:[#allocation11 + $0x178] sm:$0xff]
    %v748 = vld [vmem:[#allocation11 + $0x180] sm:$0xff]
    %v749 = vld [vmem:[#allocation11 + $0x188] sm:$0xff]
    %v750 = vld [vmem:[#allocation11 + $0x190] sm:$0xff]
    %v751 = vld [vmem:[#allocation11 + $0x198] sm:$0xff]
    %v752 = vld [vmem:[#allocation11 + $0x1a0] sm:$0xff]
    %v753 = vld [vmem:[#allocation11 + $0x1a8] sm:$0xff]
    %v754 = vld [vmem:[#allocation11 + $0x1b0] sm:$0xff]
    %v755 = vld [vmem:[#allocation11 + $0x1b8] sm:$0xff]
    %v756 = vld [vmem:[#allocation11 + $0x1c0] sm:$0xff]
    %v757 = vld [vmem:[#allocation11 + $0x1c8] sm:$0xff]
    %v758 = vld [vmem:[#allocation11 + $0x1d0] sm:$0xff]
    %v759 = vld [vmem:[#allocation11 + $0x1d8] sm:$0xff]
    %v760 = vld [vmem:[#allocation11 + $0x1e0] sm:$0xff]
    %v761 = vld [vmem:[#allocation11 + $0x1e8] sm:$0xff]
    %v762 = vld [vmem:[#allocation11 + $0x1f0] sm:$0xff]
    %v763 = vld [vmem:[#allocation11 + $0x1f8] sm:$0xff]
    %v764 = vld [vmem:[#allocation11 + $0x200] sm:$0xff]
    %v765 = vld [vmem:[#allocation11 + $0x208] sm:$0xff]
    %v766 = vld [vmem:[#allocation11 + $0x210] sm:$0xff]
    %v767 = vld [vmem:[#allocation11 + $0x218] sm:$0xff]
    %v768 = vld [vmem:[#allocation11 + $0x220] sm:$0xff]
    %v769 = vld [vmem:[#allocation11 + $0x228] sm:$0xff]
    %v770 = vld [vmem:[#allocation11 + $0x230] sm:$0xff]
    %v771 = vld [vmem:[#allocation11 + $0x238] sm:$0xff]
    %v772 = vld [vmem:[#allocation11 + $0x240] sm:$0xff]
    %v773 = vld [vmem:[#allocation11 + $0x248] sm:$0xff]
    %v774 = vld [vmem:[#allocation11 + $0x250] sm:$0xff]
    %v775 = vld [vmem:[#allocation11 + $0x258] sm:$0xff]
    %v776 = vld [vmem:[#allocation11 + $0x260] sm:$0xff]
    %v777 = vld [vmem:[#allocation11 + $0x268] sm:$0xff]
    %v778 = vld [vmem:[#allocation11 + $0x270] sm:$0xff]
    %v779 = vld [vmem:[#allocation11 + $0x278] sm:$0xff]
    %v780 = vld [vmem:[#allocation11 + $0x280] sm:$0xff]
    %v781 = vld [vmem:[#allocation11 + $0x288] sm:$0xff]
    %v782 = vld [vmem:[#allocation11 + $0x290] sm:$0xff]
    %v783 = vld [vmem:[#allocation11 + $0x298] sm:$0xff]
    %v784 = vld [vmem:[#allocation11 + $0x2a0] sm:$0xff]
    %v785 = vld [vmem:[#allocation11 + $0x2a8] sm:$0xff]
    %v786 = vld [vmem:[#allocation11 + $0x2b0] sm:$0xff]
    %v787 = vld [vmem:[#allocation11 + $0x2b8] sm:$0xff]
    %v788 = vld [vmem:[#allocation11 + $0x2c0] sm:$0xff]
    %v789 = vld [vmem:[#allocation11 + $0x2c8] sm:$0xff]
    %v790 = vld [vmem:[#allocation11 + $0x2d0] sm:$0xff]
    %v791 = vld [vmem:[#allocation11 + $0x2d8] sm:$0xff]
    %v792 = vld [vmem:[#allocation11 + $0x2e0] sm:$0xff]
    %v793 = vld [vmem:[#allocation11 + $0x2e8] sm:$0xff]
    %v794 = vld [vmem:[#allocation11 + $0x2f0] sm:$0xff]
    %v795 = vld [vmem:[#allocation11 + $0x2f8] sm:$0xff]
    %v796 = vld [vmem:[#allocation11 + $0x300] sm:$0xff]
    %v797 = vld [vmem:[#allocation11 + $0x308] sm:$0xff]
    %v798 = vld [vmem:[#allocation11 + $0x310] sm:$0xff]
    %v799 = vld [vmem:[#allocation11 + $0x318] sm:$0xff]
    %v800 = vld [vmem:[#allocation11 + $0x320] sm:$0xff]
    %v801 = vld [vmem:[#allocation11 + $0x328] sm:$0xff]
    %v802 = vld [vmem:[#allocation11 + $0x330] sm:$0xff]
    %v803 = vld [vmem:[#allocation11 + $0x338] sm:$0xff]
    %v804 = vld [vmem:[#allocation11 + $0x340] sm:$0xff]
    %v805 = vld [vmem:[#allocation11 + $0x348] sm:$0xff]
    %v806 = vld [vmem:[#allocation11 + $0x350] sm:$0xff]
    %v807 = vld [vmem:[#allocation11 + $0x358] sm:$0xff]
    %v808 = vld [vmem:[#allocation11 + $0x360] sm:$0xff]
    %v809 = vld [vmem:[#allocation11 + $0x368] sm:$0xff]
    %v810 = vld [vmem:[#allocation11 + $0x370] sm:$0xff]
    %v811 = vld [vmem:[#allocation11 + $0x378] sm:$0xff]
    %v812 = vld [vmem:[#allocation11 + $0x380] sm:$0xff]
    %v813 = vld [vmem:[#allocation11 + $0x388] sm:$0xff]
    %v814 = vld [vmem:[#allocation11 + $0x390] sm:$0xff]
    %v815 = vld [vmem:[#allocation11 + $0x398] sm:$0xff]
    %v816 = vld [vmem:[#allocation11 + $0x3a0] sm:$0xff]
    %v817 = vld [vmem:[#allocation11 + $0x3a8] sm:$0xff]
    %v818 = vld [vmem:[#allocation11 + $0x3b0] sm:$0xff]
    %v819 = vld [vmem:[#allocation11 + $0x3b8] sm:$0xff]
    %v820 = vld [vmem:[#allocation11 + $0x3c0] sm:$0xff]
    %v821 = vld [vmem:[#allocation11 + $0x3c8] sm:$0xff]
    %v822 = vld [vmem:[#allocation11 + $0x3d0] sm:$0xff]
    %v823 = vld [vmem:[#allocation11 + $0x3d8] sm:$0xff]
    %v824 = vld [vmem:[#allocation11 + $0x3e0] sm:$0xff]
    %v825 = vld [vmem:[#allocation11 + $0x3e8] sm:$0xff]
    %v826 = vld [vmem:[#allocation11 + $0x3f0] sm:$0xff]
    %v827 = vld [vmem:[#allocation11 + $0x3f8] sm:$0xff]
    %v828 = vld [vmem:[#allocation11 + $0x400] sm:$0xff]
    %v829 = vld [vmem:[#allocation11 + $0x408] sm:$0xff]
    %v830 = vld [vmem:[#allocation11 + $0x410] sm:$0xff]
    %v831 = vld [vmem:[#allocation11 + $0x418] sm:$0xff]
    %v832 = vld [vmem:[#allocation11 + $0x420] sm:$0xff]
    %v833 = vld [vmem:[#allocation11 + $0x428] sm:$0xff]
    %v834 = vld [vmem:[#allocation11 + $0x430] sm:$0xff]
    %v835 = vld [vmem:[#allocation11 + $0x438] sm:$0xff]
    %v836 = vld [vmem:[#allocation11 + $0x440] sm:$0xff]
    %v837 = vld [vmem:[#allocation11 + $0x448] sm:$0xff]
    %v838 = vld [vmem:[#allocation11 + $0x450] sm:$0xff]
    %v839 = vld [vmem:[#allocation11 + $0x458] sm:$0xff]
    %v840 = vld [vmem:[#allocation11 + $0x460] sm:$0xff]
    %v841 = vld [vmem:[#allocation11 + $0x468] sm:$0xff]
    %v842 = vld [vmem:[#allocation11 + $0x470] sm:$0xff]
    %v843 = vld [vmem:[#allocation11 + $0x478] sm:$0xff]
    %v844 = vld [vmem:[#allocation11 + $0x480] sm:$0xff]
    %v845 = vld [vmem:[#allocation11 + $0x488] sm:$0xff]
    %v846 = vld [vmem:[#allocation11 + $0x490] sm:$0xff]
    %v847 = vld [vmem:[#allocation11 + $0x498] sm:$0xff]
    %v848 = vld [vmem:[#allocation11 + $0x4a0] sm:$0xff]
    %v849 = vld [vmem:[#allocation11 + $0x4a8] sm:$0xff]
    %v850 = vld [vmem:[#allocation11 + $0x4b0] sm:$0xff]
    %v851 = vld [vmem:[#allocation11 + $0x4b8] sm:$0xff]
    %v852 = vld [vmem:[#allocation11 + $0x4c0] sm:$0xff]
    %v853 = vld [vmem:[#allocation11 + $0x4c8] sm:$0xff]
    %v854 = vld [vmem:[#allocation11 + $0x4d0] sm:$0xff]
    %v855 = vld [vmem:[#allocation11 + $0x4d8] sm:$0xff]
    %v856 = vld [vmem:[#allocation11 + $0x4e0] sm:$0xff]
    %v857 = vld [vmem:[#allocation11 + $0x4e8] sm:$0xff]
    %v858 = vld [vmem:[#allocation11 + $0x4f0] sm:$0xff]
    %v859 = vld [vmem:[#allocation11 + $0x4f8] sm:$0xff]
    %v860 = vld [vmem:[#allocation11 + $0x500] sm:$0xff]
    %v861 = vld [vmem:[#allocation11 + $0x508] sm:$0xff]
    %v862 = vld [vmem:[#allocation11 + $0x510] sm:$0xff]
    %v863 = vld [vmem:[#allocation11 + $0x518] sm:$0xff]
    %v864 = vld [vmem:[#allocation11 + $0x520] sm:$0xff]
    %v865 = vld [vmem:[#allocation11 + $0x528] sm:$0xff]
    %v866 = vld [vmem:[#allocation11 + $0x530] sm:$0xff]
    %v867 = vld [vmem:[#allocation11 + $0x538] sm:$0xff]
    %v868 = vld [vmem:[#allocation11 + $0x540] sm:$0xff]
    %v869 = vld [vmem:[#allocation11 + $0x548] sm:$0xff]
    %v870 = vld [vmem:[#allocation11 + $0x550] sm:$0xff]
    %v871 = vld [vmem:[#allocation11 + $0x558] sm:$0xff]
    %v872 = vld [vmem:[#allocation11 + $0x560] sm:$0xff]
    %v873 = vld [vmem:[#allocation11 + $0x568] sm:$0xff]
    %v874 = vld [vmem:[#allocation11 + $0x570] sm:$0xff]
    %v875 = vld [vmem:[#allocation11 + $0x578] sm:$0xff]
    %v876 = vld [vmem:[#allocation11 + $0x580] sm:$0xff]
    %v877 = vld [vmem:[#allocation11 + $0x588] sm:$0xff]
    %v878 = vld [vmem:[#allocation11 + $0x590] sm:$0xff]
    %v879 = vld [vmem:[#allocation11 + $0x598] sm:$0xff]
    %v880 = vld [vmem:[#allocation11 + $0x5a0] sm:$0xff]
    %v881 = vld [vmem:[#allocation11 + $0x5a8] sm:$0xff]
    %v882 = vld [vmem:[#allocation11 + $0x5b0] sm:$0xff]
    %v883 = vld [vmem:[#allocation11 + $0x5b8] sm:$0xff]
    %v884 = vld [vmem:[#allocation11 + $0x5c0] sm:$0xff]
    %v885 = vld [vmem:[#allocation11 + $0x5c8] sm:$0xff]
    %v886 = vld [vmem:[#allocation11 + $0x5d0] sm:$0xff]
    %v887 = vld [vmem:[#allocation11 + $0x5d8] sm:$0xff]
    %v888 = vld [vmem:[#allocation11 + $0x5e0] sm:$0xff]
    %v889 = vld [vmem:[#allocation11 + $0x5e8] sm:$0xff]
    %v890 = vld [vmem:[#allocation11 + $0x5f0] sm:$0xff]
    %v891 = vld [vmem:[#allocation11 + $0x5f8] sm:$0xff]
    %v892 = vld [vmem:[#allocation11 + $0x600] sm:$0xff]
    %v893 = vld [vmem:[#allocation11 + $0x608] sm:$0xff]
    %v894 = vld [vmem:[#allocation11 + $0x610] sm:$0xff]
    %v895 = vld [vmem:[#allocation11 + $0x618] sm:$0xff]
    %v896 = vld [vmem:[#allocation11 + $0x620] sm:$0xff]
    %v897 = vld [vmem:[#allocation11 + $0x628] sm:$0xff]
    %v898 = vld [vmem:[#allocation11 + $0x630] sm:$0xff]
    %v899 = vld [vmem:[#allocation11 + $0x638] sm:$0xff]
    %v900 = vld [vmem:[#allocation11 + $0x640] sm:$0xff]
    %v901 = vld [vmem:[#allocation11 + $0x648] sm:$0xff]
    %v902 = vld [vmem:[#allocation11 + $0x650] sm:$0xff]
    %v903 = vld [vmem:[#allocation11 + $0x658] sm:$0xff]
    %v904 = vld [vmem:[#allocation11 + $0x660] sm:$0xff]
    %v905 = vld [vmem:[#allocation11 + $0x668] sm:$0xff]
    %v906 = vld [vmem:[#allocation11 + $0x670] sm:$0xff]
    %v907 = vld [vmem:[#allocation11 + $0x678] sm:$0xff]
    %v908 = vld [vmem:[#allocation11 + $0x680] sm:$0xff]
    %v909 = vld [vmem:[#allocation11 + $0x688] sm:$0xff]
    %v910 = vld [vmem:[#allocation11 + $0x690] sm:$0xff]
    %v911 = vld [vmem:[#allocation11 + $0x698] sm:$0xff]
    %v912 = vld [vmem:[#allocation11 + $0x6a0] sm:$0xff]
    %v913 = vld [vmem:[#allocation11 + $0x6a8] sm:$0xff]
    %v914 = vld [vmem:[#allocation11 + $0x6b0] sm:$0xff]
    %v915 = vld [vmem:[#allocation11 + $0x6b8] sm:$0xff]
    %v916 = vld [vmem:[#allocation11 + $0x6c0] sm:$0xff]
    %v917 = vld [vmem:[#allocation11 + $0x6c8] sm:$0xff]
    %v918 = vld [vmem:[#allocation11 + $0x6d0] sm:$0xff]
    %v919 = vld [vmem:[#allocation11 + $0x6d8] sm:$0xff]
    %v920 = vld [vmem:[#allocation11 + $0x6e0] sm:$0xff]
    %v921 = vld [vmem:[#allocation11 + $0x6e8] sm:$0xff]
    %v922 = vld [vmem:[#allocation11 + $0x6f0] sm:$0xff]
    %v923 = vld [vmem:[#allocation11 + $0x6f8] sm:$0xff]
    %v924 = vld [vmem:[#allocation11 + $0x700] sm:$0xff]
    %v925 = vld [vmem:[#allocation11 + $0x708] sm:$0xff]
    %v926 = vld [vmem:[#allocation11 + $0x710] sm:$0xff]
    %v927 = vld [vmem:[#allocation11 + $0x718] sm:$0xff]
    %v928 = vld [vmem:[#allocation11 + $0x720] sm:$0xff]
    %v929 = vld [vmem:[#allocation11 + $0x728] sm:$0xff]
    %v930 = vld [vmem:[#allocation11 + $0x730] sm:$0xff]
    %v931 = vld [vmem:[#allocation11 + $0x738] sm:$0xff]
    %v932 = vld [vmem:[#allocation11 + $0x740] sm:$0xff]
    %v933 = vld [vmem:[#allocation11 + $0x748] sm:$0xff]
    %v934 = vld [vmem:[#allocation11 + $0x750] sm:$0xff]
    %v935 = vld [vmem:[#allocation11 + $0x758] sm:$0xff]
    %v936 = vld [vmem:[#allocation11 + $0x760] sm:$0xff]
    %v937 = vld [vmem:[#allocation11 + $0x768] sm:$0xff]
    %v938 = vld [vmem:[#allocation11 + $0x770] sm:$0xff]
    %v939 = vld [vmem:[#allocation11 + $0x778] sm:$0xff]
    %v940 = vld [vmem:[#allocation11 + $0x780] sm:$0xff]
    %v941 = vld [vmem:[#allocation11 + $0x788] sm:$0xff]
    %v942 = vld [vmem:[#allocation11 + $0x790] sm:$0xff]
    %v943 = vld [vmem:[#allocation11 + $0x798] sm:$0xff]
    %v944 = vld [vmem:[#allocation11 + $0x7a0] sm:$0xff]
    %v945 = vld [vmem:[#allocation11 + $0x7a8] sm:$0xff]
    %v946 = vld [vmem:[#allocation11 + $0x7b0] sm:$0xff]
    %v947 = vld [vmem:[#allocation11 + $0x7b8] sm:$0xff]
    %v948 = vld [vmem:[#allocation11 + $0x7c0] sm:$0xff]
    %v949 = vld [vmem:[#allocation11 + $0x7c8] sm:$0xff]
    %v950 = vld [vmem:[#allocation11 + $0x7d0] sm:$0xff]
    %v951 = vld [vmem:[#allocation11 + $0x7d8] sm:$0xff]
    %v952 = vld [vmem:[#allocation11 + $0x7e0] sm:$0xff]
    %v953 = vld [vmem:[#allocation11 + $0x7e8] sm:$0xff]
    %v954 = vld [vmem:[#allocation11 + $0x7f0] sm:$0xff]
    %v955 = vld [vmem:[#allocation11 + $0x7f8] sm:$0xff]
    %v956 = vld [vmem:[#allocation11 + $0x800] sm:$0xff]
    %v957 = vld [vmem:[#allocation11 + $0x808] sm:$0xff]
    %v958 = vld [vmem:[#allocation11 + $0x810] sm:$0xff]
    %v959 = vld [vmem:[#allocation11 + $0x818] sm:$0xff]
    %v960 = vld [vmem:[#allocation11 + $0x820] sm:$0xff]
    %v961 = vld [vmem:[#allocation11 + $0x828] sm:$0xff]
    %v962 = vld [vmem:[#allocation11 + $0x830] sm:$0xff]
    %v963 = vld [vmem:[#allocation11 + $0x838] sm:$0xff]
    %v964 = vld [vmem:[#allocation11 + $0x840] sm:$0xff]
    %v965 = vld [vmem:[#allocation11 + $0x848] sm:$0xff]
    %v966 = vld [vmem:[#allocation11 + $0x850] sm:$0xff]
    %v967 = vld [vmem:[#allocation11 + $0x858] sm:$0xff]
    %v968 = vld [vmem:[#allocation11 + $0x860] sm:$0xff]
    %v969 = vld [vmem:[#allocation11 + $0x868] sm:$0xff]
    %v970 = vld [vmem:[#allocation11 + $0x870] sm:$0xff]
    %v971 = vld [vmem:[#allocation11 + $0x878] sm:$0xff]
    %v972 = vld [vmem:[#allocation11 + $0x880] sm:$0xff]
    %v973 = vld [vmem:[#allocation11 + $0x888] sm:$0xff]
    %v974 = vld [vmem:[#allocation11 + $0x890] sm:$0xff]
    %v975 = vld [vmem:[#allocation11 + $0x898] sm:$0xff]
    %v976 = vld [vmem:[#allocation11 + $0x8a0] sm:$0xff]
    %v977 = vld [vmem:[#allocation11 + $0x8a8] sm:$0xff]
    %v978 = vld [vmem:[#allocation11 + $0x8b0] sm:$0xff]
    %v979 = vld [vmem:[#allocation11 + $0x8b8] sm:$0xff]
    %v980 = vld [vmem:[#allocation11 + $0x8c0] sm:$0xff]
    %v981 = vld [vmem:[#allocation11 + $0x8c8] sm:$0xff]
    %v982 = vld [vmem:[#allocation11 + $0x8d0] sm:$0xff]
    %v983 = vld [vmem:[#allocation11 + $0x8d8] sm:$0xff]
    %v984 = vld [vmem:[#allocation11 + $0x8e0] sm:$0xff]
    %v985 = vld [vmem:[#allocation11 + $0x8e8] sm:$0xff]
    %v986 = vld [vmem:[#allocation11 + $0x8f0] sm:$0xff]
    %v987 = vld [vmem:[#allocation11 + $0x8f8] sm:$0xff]
    %v988 = vld [vmem:[#allocation11 + $0x900] sm:$0xff]
    %v989 = vld [vmem:[#allocation11 + $0x908] sm:$0xff]
    %v990 = vld [vmem:[#allocation11 + $0x910] sm:$0xff]
    %v991 = vld [vmem:[#allocation11 + $0x918] sm:$0xff]
    %v992 = vld [vmem:[#allocation11 + $0x920] sm:$0xff]
    %v993 = vld [vmem:[#allocation11 + $0x928] sm:$0xff]
    %v994 = vld [vmem:[#allocation11 + $0x930] sm:$0xff]
    %v995 = vld [vmem:[#allocation11 + $0x938] sm:$0xff]
    %v996 = vld [vmem:[#allocation11 + $0x940] sm:$0xff]
    %v997 = vld [vmem:[#allocation11 + $0x948] sm:$0xff]
    %v998 = vld [vmem:[#allocation11 + $0x950] sm:$0xff]
    %v999 = vld [vmem:[#allocation11 + $0x958] sm:$0xff]
    %v1000 = vld [vmem:[#allocation11 + $0x960] sm:$0xff]
    %v1001 = vld [vmem:[#allocation11 + $0x968] sm:$0xff]
    %v1002 = vld [vmem:[#allocation11 + $0x970] sm:$0xff]
    %v1003 = vld [vmem:[#allocation11 + $0x978] sm:$0xff]
    %v1004 = vld [vmem:[#allocation11 + $0x980] sm:$0xff]
    %v1005 = vld [vmem:[#allocation11 + $0x988] sm:$0xff]
    %v1006 = vld [vmem:[#allocation11 + $0x990] sm:$0xff]
    %v1007 = vld [vmem:[#allocation11 + $0x998] sm:$0xff]
    %v1008 = vld [vmem:[#allocation11 + $0x9a0] sm:$0xff]
    %v1009 = vld [vmem:[#allocation11 + $0x9a8] sm:$0xff]
    %v1010 = vld [vmem:[#allocation11 + $0x9b0] sm:$0xff]
    %v1011 = vld [vmem:[#allocation11 + $0x9b8] sm:$0xff]
    %v1012 = vld [vmem:[#allocation11 + $0x9c0] sm:$0xff]
    %v1013 = vld [vmem:[#allocation11 + $0x9c8] sm:$0xff]
    %v1014 = vld [vmem:[#allocation11 + $0x9d0] sm:$0xff]
    %v1015 = vld [vmem:[#allocation11 + $0x9d8] sm:$0xff]
    %v1016 = vld [vmem:[#allocation11 + $0x9e0] sm:$0xff]
    %v1017 = vld [vmem:[#allocation11 + $0x9e8] sm:$0xff]
    %v1018 = vld [vmem:[#allocation11 + $0x9f0] sm:$0xff]
    %v1019 = vld [vmem:[#allocation11 + $0x9f8] sm:$0xff]
    %v1020 = vld [vmem:[#allocation11 + $0xa00] sm:$0xff]
    %v1021 = vld [vmem:[#allocation11 + $0xa08] sm:$0xff]
    %v1022 = vld [vmem:[#allocation11 + $0xa10] sm:$0xff]
    %v1023 = vld [vmem:[#allocation11 + $0xa18] sm:$0xff]
    %v1024 = vld [vmem:[#allocation11 + $0xa20] sm:$0xff]
    %v1025 = vld [vmem:[#allocation11 + $0xa28] sm:$0xff]
    %v1026 = vld [vmem:[#allocation11 + $0xa30] sm:$0xff]
    %v1027 = vld [vmem:[#allocation11 + $0xa38] sm:$0xff]
    %v1028 = vld [vmem:[#allocation11 + $0xa40] sm:$0xff]
    %v1029 = vld [vmem:[#allocation11 + $0xa48] sm:$0xff]
    %v1030 = vld [vmem:[#allocation11 + $0xa50] sm:$0xff]
    %v1031 = vld [vmem:[#allocation11 + $0xa58] sm:$0xff]
    %v1032 = vld [vmem:[#allocation11 + $0xa60] sm:$0xff]
    %v1033 = vld [vmem:[#allocation11 + $0xa68] sm:$0xff]
    %v1034 = vld [vmem:[#allocation11 + $0xa70] sm:$0xff]
    %v1035 = vld [vmem:[#allocation11 + $0xa78] sm:$0xff]
    %v1036 = vld [vmem:[#allocation11 + $0xa80] sm:$0xff]
    %v1037 = vld [vmem:[#allocation11 + $0xa88] sm:$0xff]
    %v1038 = vld [vmem:[#allocation11 + $0xa90] sm:$0xff]
    %v1039 = vld [vmem:[#allocation11 + $0xa98] sm:$0xff]
    %v1040 = vld [vmem:[#allocation11 + $0xaa0] sm:$0xff]
    %v1041 = vld [vmem:[#allocation11 + $0xaa8] sm:$0xff]
    %v1042 = vld [vmem:[#allocation11 + $0xab0] sm:$0xff]
    %v1043 = vld [vmem:[#allocation11 + $0xab8] sm:$0xff]
    %v1044 = vld [vmem:[#allocation11 + $0xac0] sm:$0xff]
    %v1045 = vld [vmem:[#allocation11 + $0xac8] sm:$0xff]
    %v1046 = vld [vmem:[#allocation11 + $0xad0] sm:$0xff]
    %v1047 = vld [vmem:[#allocation11 + $0xad8] sm:$0xff]
    %v1048 = vld [vmem:[#allocation11 + $0xae0] sm:$0xff]
    %v1049 = vld [vmem:[#allocation11 + $0xae8] sm:$0xff]
    %v1050 = vld [vmem:[#allocation11 + $0xaf0] sm:$0xff]
    %v1051 = vld [vmem:[#allocation11 + $0xaf8] sm:$0xff]
    %v1052 = vld [vmem:[#allocation11 + $0xb00] sm:$0xff]
    %v1053 = vld [vmem:[#allocation11 + $0xb08] sm:$0xff]
    %v1054 = vld [vmem:[#allocation11 + $0xb10] sm:$0xff]
    %v1055 = vld [vmem:[#allocation11 + $0xb18] sm:$0xff]
    %v1056 = vld [vmem:[#allocation11 + $0xb20] sm:$0xff]
    %v1057 = vld [vmem:[#allocation11 + $0xb28] sm:$0xff]
    %v1058 = vld [vmem:[#allocation11 + $0xb30] sm:$0xff]
    %v1059 = vld [vmem:[#allocation11 + $0xb38] sm:$0xff]
    %v1060 = vld [vmem:[#allocation11 + $0xb40] sm:$0xff]
    %v1061 = vld [vmem:[#allocation11 + $0xb48] sm:$0xff]
    %v1062 = vld [vmem:[#allocation11 + $0xb50] sm:$0xff]
    %v1063 = vld [vmem:[#allocation11 + $0xb58] sm:$0xff]
    %v1064 = vld [vmem:[#allocation11 + $0xb60] sm:$0xff]
    %v1065 = vld [vmem:[#allocation11 + $0xb68] sm:$0xff]
    %v1066 = vld [vmem:[#allocation11 + $0xb70] sm:$0xff]
    %v1067 = vld [vmem:[#allocation11 + $0xb78] sm:$0xff]
    %v1068 = vld [vmem:[#allocation11 + $0xb80] sm:$0xff]
    %v1069 = vld [vmem:[#allocation11 + $0xb88] sm:$0xff]
    %v1070 = vld [vmem:[#allocation11 + $0xb90] sm:$0xff]
    %v1071 = vld [vmem:[#allocation11 + $0xb98] sm:$0xff]
    %v1072 = vld [vmem:[#allocation11 + $0xba0] sm:$0xff]
    %v1073 = vld [vmem:[#allocation11 + $0xba8] sm:$0xff]
    %v1074 = vld [vmem:[#allocation11 + $0xbb0] sm:$0xff]
    %v1075 = vld [vmem:[#allocation11 + $0xbb8] sm:$0xff]
    %v1076 = vld [vmem:[#allocation11 + $0xbc0] sm:$0xff]
    %v1077 = vld [vmem:[#allocation11 + $0xbc8] sm:$0xff]
    %v1078 = vld [vmem:[#allocation11 + $0xbd0] sm:$0xff]
    %v1079 = vld [vmem:[#allocation11 + $0xbd8] sm:$0xff]
    %v1080 = vld [vmem:[#allocation11 + $0xbe0] sm:$0xff]
    %v1081 = vld [vmem:[#allocation11 + $0xbe8] sm:$0xff]
    %v1082 = vld [vmem:[#allocation11 + $0xbf0] sm:$0xff]
    %v1083 = vld [vmem:[#allocation11 + $0xbf8] sm:$0xff]
    %v1084 = vld [vmem:[#allocation11 + $0xc00] sm:$0xff]
    %v1085 = vld [vmem:[#allocation11 + $0xc08] sm:$0xff]
    %v1086 = vld [vmem:[#allocation11 + $0xc10] sm:$0xff]
    %v1087 = vld [vmem:[#allocation11 + $0xc18] sm:$0xff]
    %v1088 = vld [vmem:[#allocation11 + $0xc20] sm:$0xff]
    %v1089 = vld [vmem:[#allocation11 + $0xc28] sm:$0xff]
    %v1090 = vld [vmem:[#allocation11 + $0xc30] sm:$0xff]
    %v1091 = vld [vmem:[#allocation11 + $0xc38] sm:$0xff]
    %v1092 = vld [vmem:[#allocation11 + $0xc40] sm:$0xff]
    %v1093 = vld [vmem:[#allocation11 + $0xc48] sm:$0xff]
    %v1094 = vld [vmem:[#allocation11 + $0xc50] sm:$0xff]
    %v1095 = vld [vmem:[#allocation11 + $0xc58] sm:$0xff]
    %v1096 = vld [vmem:[#allocation11 + $0xc60] sm:$0xff]
    %v1097 = vld [vmem:[#allocation11 + $0xc68] sm:$0xff]
    %v1098 = vld [vmem:[#allocation11 + $0xc70] sm:$0xff]
    %v1099 = vld [vmem:[#allocation11 + $0xc78] sm:$0xff]
    %v1100 = vld [vmem:[#allocation11 + $0xc80] sm:$0xff]
    %v1101 = vld [vmem:[#allocation11 + $0xc88] sm:$0xff]
    %v1102 = vld [vmem:[#allocation11 + $0xc90] sm:$0xff]
    %v1103 = vld [vmem:[#allocation11 + $0xc98] sm:$0xff]
    %v1104 = vld [vmem:[#allocation11 + $0xca0] sm:$0xff]
    %v1105 = vld [vmem:[#allocation11 + $0xca8] sm:$0xff]
    %v1106 = vld [vmem:[#allocation11 + $0xcb0] sm:$0xff]
    %v1107 = vld [vmem:[#allocation11 + $0xcb8] sm:$0xff]
    %v1108 = vld [vmem:[#allocation11 + $0xcc0] sm:$0xff]
    %v1109 = vld [vmem:[#allocation11 + $0xcc8] sm:$0xff]
    %v1110 = vld [vmem:[#allocation11 + $0xcd0] sm:$0xff]
    %v1111 = vld [vmem:[#allocation11 + $0xcd8] sm:$0xff]
    %v1112 = vld [vmem:[#allocation11 + $0xce0] sm:$0xff]
    %v1113 = vld [vmem:[#allocation11 + $0xce8] sm:$0xff]
    %v1114 = vld [vmem:[#allocation11 + $0xcf0] sm:$0xff]
    %v1115 = vld [vmem:[#allocation11 + $0xcf8] sm:$0xff]
    %v1116 = vld [vmem:[#allocation11 + $0xd00] sm:$0xff]
    %v1117 = vld [vmem:[#allocation11 + $0xd08] sm:$0xff]
    %v1118 = vld [vmem:[#allocation11 + $0xd10] sm:$0xff]
    %v1119 = vld [vmem:[#allocation11 + $0xd18] sm:$0xff]
    %v1120 = vld [vmem:[#allocation11 + $0xd20] sm:$0xff]
    %v1121 = vld [vmem:[#allocation11 + $0xd28] sm:$0xff]
    %v1122 = vld [vmem:[#allocation11 + $0xd30] sm:$0xff]
    %v1123 = vld [vmem:[#allocation11 + $0xd38] sm:$0xff]
    %v1124 = vld [vmem:[#allocation11 + $0xd40] sm:$0xff]
    %v1125 = vld [vmem:[#allocation11 + $0xd48] sm:$0xff]
    %v1126 = vld [vmem:[#allocation11 + $0xd50] sm:$0xff]
    %v1127 = vld [vmem:[#allocation11 + $0xd58] sm:$0xff]
    %v1128 = vld [vmem:[#allocation11 + $0xd60] sm:$0xff]
    %v1129 = vld [vmem:[#allocation11 + $0xd68] sm:$0xff]
    %v1130 = vld [vmem:[#allocation11 + $0xd70] sm:$0xff]
    %v1131 = vld [vmem:[#allocation11 + $0xd78] sm:$0xff]
    %v1132 = vld [vmem:[#allocation11 + $0xd80] sm:$0xff]
    %v1133 = vld [vmem:[#allocation11 + $0xd88] sm:$0xff]
    %v1134 = vld [vmem:[#allocation11 + $0xd90] sm:$0xff]
    %v1135 = vld [vmem:[#allocation11 + $0xd98] sm:$0xff]
    %v1136 = vld [vmem:[#allocation11 + $0xda0] sm:$0xff]
    %v1137 = vld [vmem:[#allocation11 + $0xda8] sm:$0xff]
    %v1138 = vld [vmem:[#allocation11 + $0xdb0] sm:$0xff]
    %v1139 = vld [vmem:[#allocation11 + $0xdb8] sm:$0xff]
    %v1140 = vld [vmem:[#allocation11 + $0xdc0] sm:$0xff]
    %v1141 = vld [vmem:[#allocation11 + $0xdc8] sm:$0xff]
    %v1142 = vld [vmem:[#allocation11 + $0xdd0] sm:$0xff]
    %v1143 = vld [vmem:[#allocation11 + $0xdd8] sm:$0xff]
    %v1144 = vld [vmem:[#allocation11 + $0xde0] sm:$0xff]
    %v1145 = vld [vmem:[#allocation11 + $0xde8] sm:$0xff]
    %v1146 = vld [vmem:[#allocation11 + $0xdf0] sm:$0xff]
    %v1147 = vld [vmem:[#allocation11 + $0xdf8] sm:$0xff]
    %v1148 = vld [vmem:[#allocation11 + $0xe00] sm:$0xff]
    %v1149 = vld [vmem:[#allocation11 + $0xe08] sm:$0xff]
    %v1150 = vld [vmem:[#allocation11 + $0xe10] sm:$0xff]
    %v1151 = vld [vmem:[#allocation11 + $0xe18] sm:$0xff]
    %v1152 = vld [vmem:[#allocation11 + $0xe20] sm:$0xff]
    %v1153 = vld [vmem:[#allocation11 + $0xe28] sm:$0xff]
    %v1154 = vld [vmem:[#allocation11 + $0xe30] sm:$0xff]
    %v1155 = vld [vmem:[#allocation11 + $0xe38] sm:$0xff]
    %v1156 = vld [vmem:[#allocation11 + $0xe40] sm:$0xff]
    %v1157 = vld [vmem:[#allocation11 + $0xe48] sm:$0xff]
    %v1158 = vld [vmem:[#allocation11 + $0xe50] sm:$0xff]
    %v1159 = vld [vmem:[#allocation11 + $0xe58] sm:$0xff]
    %v1160 = vld [vmem:[#allocation11 + $0xe60] sm:$0xff]
    %v1161 = vld [vmem:[#allocation11 + $0xe68] sm:$0xff]
    %v1162 = vld [vmem:[#allocation11 + $0xe70] sm:$0xff]
    %v1163 = vld [vmem:[#allocation11 + $0xe78] sm:$0xff]
    %v1164 = vld [vmem:[#allocation11 + $0xe80] sm:$0xff]
    %v1165 = vld [vmem:[#allocation11 + $0xe88] sm:$0xff]
    %v1166 = vld [vmem:[#allocation11 + $0xe90] sm:$0xff]
    %v1167 = vld [vmem:[#allocation11 + $0xe98] sm:$0xff]
    %v1168 = vld [vmem:[#allocation11 + $0xea0] sm:$0xff]
    %v1169 = vld [vmem:[#allocation11 + $0xea8] sm:$0xff]
    %v1170 = vld [vmem:[#allocation11 + $0xeb0] sm:$0xff]
    %v1171 = vld [vmem:[#allocation11 + $0xeb8] sm:$0xff]
    %v1172 = vld [vmem:[#allocation11 + $0xec0] sm:$0xff]
    %v1173 = vld [vmem:[#allocation11 + $0xec8] sm:$0xff]
    %v1174 = vld [vmem:[#allocation11 + $0xed0] sm:$0xff]
    %v1175 = vld [vmem:[#allocation11 + $0xed8] sm:$0xff]
    %v1176 = vld [vmem:[#allocation11 + $0xee0] sm:$0xff]
    %v1177 = vld [vmem:[#allocation11 + $0xee8] sm:$0xff]
    %v1178 = vld [vmem:[#allocation11 + $0xef0] sm:$0xff]
    %v1179 = vld [vmem:[#allocation11 + $0xef8] sm:$0xff]
    %v1180 = vld [vmem:[#allocation11 + $0xf00] sm:$0xff]
    %v1181 = vld [vmem:[#allocation11 + $0xf08] sm:$0xff]
    %v1182 = vld [vmem:[#allocation11 + $0xf10] sm:$0xff]
    %v1183 = vld [vmem:[#allocation11 + $0xf18] sm:$0xff]
    %v1184 = vld [vmem:[#allocation11 + $0xf20] sm:$0xff]
    %v1185 = vld [vmem:[#allocation11 + $0xf28] sm:$0xff]
    %v1186 = vld [vmem:[#allocation11 + $0xf30] sm:$0xff]
    %v1187 = vld [vmem:[#allocation11 + $0xf38] sm:$0xff]
    %v1188 = vld [vmem:[#allocation11 + $0xf40] sm:$0xff]
    %v1189 = vld [vmem:[#allocation11 + $0xf48] sm:$0xff]
    %v1190 = vld [vmem:[#allocation11 + $0xf50] sm:$0xff]
    %v1191 = vld [vmem:[#allocation11 + $0xf58] sm:$0xff]
    %v1192 = vld [vmem:[#allocation11 + $0xf60] sm:$0xff]
    %v1193 = vld [vmem:[#allocation11 + $0xf68] sm:$0xff]
    %v1194 = vld [vmem:[#allocation11 + $0xf70] sm:$0xff]
    %v1195 = vld [vmem:[#allocation11 + $0xf78] sm:$0xff]
    %v1196 = vld [vmem:[#allocation11 + $0xf80] sm:$0xff]
    %v1197 = vld [vmem:[#allocation11 + $0xf88] sm:$0xff]
    %v1198 = vld [vmem:[#allocation11 + $0xf90] sm:$0xff]
    %v1199 = vld [vmem:[#allocation11 + $0xf98] sm:$0xff]
    %v1200 = vld [vmem:[#allocation11 + $0xfa0] sm:$0xff]
    %v1201 = vld [vmem:[#allocation11 + $0xfa8] sm:$0xff]
    %v1202 = vld [vmem:[#allocation11 + $0xfb0] sm:$0xff]
    %v1203 = vld [vmem:[#allocation11 + $0xfb8] sm:$0xff]
    %v1204 = vld [vmem:[#allocation11 + $0xfc0] sm:$0xff]
    %v1205 = vld [vmem:[#allocation11 + $0xfc8] sm:$0xff]
    %v1206 = vld [vmem:[#allocation11 + $0xfd0] sm:$0xff]
    %v1207 = vld [vmem:[#allocation11 + $0xfd8] sm:$0xff]
    %v1208 = vld [vmem:[#allocation11 + $0xfe0] sm:$0xff]
    %v1209 = vld [vmem:[#allocation11 + $0xfe8] sm:$0xff]
    %v1210 = vld [vmem:[#allocation11 + $0xff0] sm:$0xff]
    %v1211 = vld [vmem:[#allocation11 + $0xff8] sm:$0xff]
    %v1212 = vld [vmem:[#allocation13] sm:$0xf]
    %v1214 = vperm.slane %v1212, 0
    %v1215 = vperm.slane %v1212, 1
    %v1216 = vperm.slane %v1212, 2
    %v1217 = vperm.slane %v1212, 3
    %1222 = vmatpush.msra.mxu0 %v760
    %1223 = vmatpush.msra.mxu0 %v756
    %1224 = vmatpush.msra.mxu0 %v752
    %1225 = vmatpush.msra.mxu0 %v748
    %1226 = vmatpush.msra.mxu0 %v744
    %1227 = vmatpush.msra.mxu0 %v740
    %1228 = vmatpush.msra.mxu0 %v736
    %1229 = vmatpush.msra.mxu0 %v732
    %1230 = vmatpush.msra.mxu0 %v728
    %1231 = vmatpush.msra.mxu0 %v724
    %1232 = vmatpush.msra.mxu0 %v720
    %1233 = vmatpush.msra.mxu0 %v716
    %1234 = vmatpush.msra.mxu0 %v712
    %1235 = vmatpush.msra.mxu0 %v708
    %1236 = vmatpush.msra.mxu0 %v704
    %1237 = vmatpush.msra.mxu0 %v700
    %1238 = vmatmul.f32.gmra.mxu0 %v692
    %v1239 = vpop.f32.mrf.mxu0
    %v1240 = vadd.f32 %v1214, %v1239
    %1241 = vdwg.mxu0
    %1242 = vmatpush.msra.mxu0 %v824
    %1243 = vmatpush.msra.mxu0 %v820
    %1244 = vmatpush.msra.mxu0 %v816
    %1245 = vmatpush.msra.mxu0 %v812
    %1246 = vmatpush.msra.mxu0 %v808
    %1247 = vmatpush.msra.mxu0 %v804
    %1248 = vmatpush.msra.mxu0 %v800
    %1249 = vmatpush.msra.mxu0 %v796
    %1250 = vmatpush.msra.mxu0 %v792
    %1251 = vmatpush.msra.mxu0 %v788
    %1252 = vmatpush.msra.mxu0 %v784
    %1253 = vmatpush.msra.mxu0 %v780
    %1254 = vmatpush.msra.mxu0 %v776
    %1255 = vmatpush.msra.mxu0 %v772
    %1256 = vmatpush.msra.mxu0 %v768
    %1257 = vmatpush.msra.mxu0 %v764
    %1258 = vmatmul.f32.gmra.mxu0 %v693
    %v1259 = vpop.f32.mrf.mxu0
    %v1260 = vadd.f32 %v1240, %v1259
    %1261 = vdwg.mxu0
    %1262 = vmatpush.msra.mxu0 %v888
    %1263 = vmatpush.msra.mxu0 %v884
    %1264 = vmatpush.msra.mxu0 %v880
    %1265 = vmatpush.msra.mxu0 %v876
    %1266 = vmatpush.msra.mxu0 %v872
    %1267 = vmatpush.msra.mxu0 %v868
    %1268 = vmatpush.msra.mxu0 %v864
    %1269 = vmatpush.msra.mxu0 %v860
    %1270 = vmatpush.msra.mxu0 %v856
    %1271 = vmatpush.msra.mxu0 %v852
    %1272 = vmatpush.msra.mxu0 %v848
    %1273 = vmatpush.msra.mxu0 %v844
    %1274 = vmatpush.msra.mxu0 %v840
    %1275 = vmatpush.msra.mxu0 %v836
    %1276 = vmatpush.msra.mxu0 %v832
    %1277 = vmatpush.msra.mxu0 %v828
    %1278 = vmatmul.f32.gmra.mxu0 %v694
    %v1279 = vpop.f32.mrf.mxu0
    %v1280 = vadd.f32 %v1260, %v1279
    %1281 = vdwg.mxu0
    %1282 = vmatpush.msra.mxu0 %v952
    %1283 = vmatpush.msra.mxu0 %v948
    %1284 = vmatpush.msra.mxu0 %v944
    %1285 = vmatpush.msra.mxu0 %v940
    %1286 = vmatpush.msra.mxu0 %v936
    %1287 = vmatpush.msra.mxu0 %v932
    %1288 = vmatpush.msra.mxu0 %v928
    %1289 = vmatpush.msra.mxu0 %v924
    %1290 = vmatpush.msra.mxu0 %v920
    %1291 = vmatpush.msra.mxu0 %v916
    %1292 = vmatpush.msra.mxu0 %v912
    %1293 = vmatpush.msra.mxu0 %v908
    %1294 = vmatpush.msra.mxu0 %v904
    %1295 = vmatpush.msra.mxu0 %v900
    %1296 = vmatpush.msra.mxu0 %v896
    %1297 = vmatpush.msra.mxu0 %v892
    %1298 = vmatmul.f32.gmra.mxu0 %v695
    %v1299 = vpop.f32.mrf.mxu0
    %v1300 = vadd.f32 %v1280, %v1299
    %1301 = vdwg.mxu0
    %1302 = vmatpush.msra.mxu0 %v1016
    %1303 = vmatpush.msra.mxu0 %v1012
    %1304 = vmatpush.msra.mxu0 %v1008
    %1305 = vmatpush.msra.mxu0 %v1004
    %1306 = vmatpush.msra.mxu0 %v1000
    %1307 = vmatpush.msra.mxu0 %v996
    %1308 = vmatpush.msra.mxu0 %v992
    %1309 = vmatpush.msra.mxu0 %v988
    %1310 = vmatpush.msra.mxu0 %v984
    %1311 = vmatpush.msra.mxu0 %v980
    %1312 = vmatpush.msra.mxu0 %v976
    %1313 = vmatpush.msra.mxu0 %v972
    %1314 = vmatpush.msra.mxu0 %v968
    %1315 = vmatpush.msra.mxu0 %v964
    %1316 = vmatpush.msra.mxu0 %v960
    %1317 = vmatpush.msra.mxu0 %v956
    %1318 = vmatmul.f32.gmra.mxu0 %v696
    %v1319 = vpop.f32.mrf.mxu0
    %v1320 = vadd.f32 %v1300, %v1319
    %1321 = vdwg.mxu0
    %1322 = vmatpush.msra.mxu0 %v1080
    %1323 = vmatpush.msra.mxu0 %v1076
    %1324 = vmatpush.msra.mxu0 %v1072
    %1325 = vmatpush.msra.mxu0 %v1068
    %1326 = vmatpush.msra.mxu0 %v1064
    %1327 = vmatpush.msra.mxu0 %v1060
    %1328 = vmatpush.msra.mxu0 %v1056
    %1329 = vmatpush.msra.mxu0 %v1052
    %1330 = vmatpush.msra.mxu0 %v1048
    %1331 = vmatpush.msra.mxu0 %v1044
    %1332 = vmatpush.msra.mxu0 %v1040
    %1333 = vmatpush.msra.mxu0 %v1036
    %1334 = vmatpush.msra.mxu0 %v1032
    %1335 = vmatpush.msra.mxu0 %v1028
    %1336 = vmatpush.msra.mxu0 %v1024
    %1337 = vmatpush.msra.mxu0 %v1020
    %1338 = vmatmul.f32.gmra.mxu0 %v697
    %v1339 = vpop.f32.mrf.mxu0
    %v1340 = vadd.f32 %v1320, %v1339
    %1341 = vdwg.mxu0
    %1342 = vmatpush.msra.mxu0 %v1144
    %1343 = vmatpush.msra.mxu0 %v1140
    %1344 = vmatpush.msra.mxu0 %v1136
    %1345 = vmatpush.msra.mxu0 %v1132
    %1346 = vmatpush.msra.mxu0 %v1128
    %1347 = vmatpush.msra.mxu0 %v1124
    %1348 = vmatpush.msra.mxu0 %v1120
    %1349 = vmatpush.msra.mxu0 %v1116
    %1350 = vmatpush.msra.mxu0 %v1112
    %1351 = vmatpush.msra.mxu0 %v1108
    %1352 = vmatpush.msra.mxu0 %v1104
    %1353 = vmatpush.msra.mxu0 %v1100
    %1354 = vmatpush.msra.mxu0 %v1096
    %1355 = vmatpush.msra.mxu0 %v1092
    %1356 = vmatpush.msra.mxu0 %v1088
    %1357 = vmatpush.msra.mxu0 %v1084
    %1358 = vmatmul.f32.gmra.mxu0 %v698
    %v1359 = vpop.f32.mrf.mxu0
    %v1360 = vadd.f32 %v1340, %v1359
    %1361 = vdwg.mxu0
    %1362 = vmatpush.msra.mxu0 %v1208
    %1363 = vmatpush.msra.mxu0 %v1204
    %1364 = vmatpush.msra.mxu0 %v1200
    %1365 = vmatpush.msra.mxu0 %v1196
    %1366 = vmatpush.msra.mxu0 %v1192
    %1367 = vmatpush.msra.mxu0 %v1188
    %1368 = vmatpush.msra.mxu0 %v1184
    %1369 = vmatpush.msra.mxu0 %v1180
    %1370 = vmatpush.msra.mxu0 %v1176
    %1371 = vmatpush.msra.mxu0 %v1172
    %1372 = vmatpush.msra.mxu0 %v1168
    %1373 = vmatpush.msra.mxu0 %v1164
    %1374 = vmatpush.msra.mxu0 %v1160
    %1375 = vmatpush.msra.mxu0 %v1156
    %1376 = vmatpush.msra.mxu0 %v1152
    %1377 = vmatpush.msra.mxu0 %v1148
    %1378 = vmatmul.f32.gmra.mxu0 %v699
    %v1379 = vpop.f32.mrf.mxu0
    %v1380 = vadd.f32 %v1360, %v1379
    %1381 = vdwg.mxu0
    %1382 = vmatpush.msra.mxu0 %v761
    %1383 = vmatpush.msra.mxu0 %v757
    %1384 = vmatpush.msra.mxu0 %v753
    %1385 = vmatpush.msra.mxu0 %v749
    %1386 = vmatpush.msra.mxu0 %v745
    %1387 = vmatpush.msra.mxu0 %v741
    %1388 = vmatpush.msra.mxu0 %v737
    %1389 = vmatpush.msra.mxu0 %v733
    %1390 = vmatpush.msra.mxu0 %v729
    %1391 = vmatpush.msra.mxu0 %v725
    %1392 = vmatpush.msra.mxu0 %v721
    %1393 = vmatpush.msra.mxu0 %v717
    %1394 = vmatpush.msra.mxu0 %v713
    %1395 = vmatpush.msra.mxu0 %v709
    %1396 = vmatpush.msra.mxu0 %v705
    %1397 = vmatpush.msra.mxu0 %v701
    %1398 = vmatmul.f32.gmra.mxu0 %v692
    %v1399 = vpop.f32.mrf.mxu0
    %v1400 = vadd.f32 %v1215, %v1399
    %1401 = vdwg.mxu0
    %1402 = vmatpush.msra.mxu0 %v825
    %1403 = vmatpush.msra.mxu0 %v821
    %1404 = vmatpush.msra.mxu0 %v817
    %1405 = vmatpush.msra.mxu0 %v813
    %1406 = vmatpush.msra.mxu0 %v809
    %1407 = vmatpush.msra.mxu0 %v805
    %1408 = vmatpush.msra.mxu0 %v801
    %1409 = vmatpush.msra.mxu0 %v797
    %1410 = vmatpush.msra.mxu0 %v793
    %1411 = vmatpush.msra.mxu0 %v789
    %1412 = vmatpush.msra.mxu0 %v785
    %1413 = vmatpush.msra.mxu0 %v781
    %1414 = vmatpush.msra.mxu0 %v777
    %1415 = vmatpush.msra.mxu0 %v773
    %1416 = vmatpush.msra.mxu0 %v769
    %1417 = vmatpush.msra.mxu0 %v765
    %1418 = vmatmul.f32.gmra.mxu0 %v693
    %v1419 = vpop.f32.mrf.mxu0
    %v1420 = vadd.f32 %v1400, %v1419
    %1421 = vdwg.mxu0
    %1422 = vmatpush.msra.mxu0 %v889
    %1423 = vmatpush.msra.mxu0 %v885
    %1424 = vmatpush.msra.mxu0 %v881
    %1425 = vmatpush.msra.mxu0 %v877
    %1426 = vmatpush.msra.mxu0 %v873
    %1427 = vmatpush.msra.mxu0 %v869
    %1428 = vmatpush.msra.mxu0 %v865
    %1429 = vmatpush.msra.mxu0 %v861
    %1430 = vmatpush.msra.mxu0 %v857
    %1431 = vmatpush.msra.mxu0 %v853
    %1432 = vmatpush.msra.mxu0 %v849
    %1433 = vmatpush.msra.mxu0 %v845
    %1434 = vmatpush.msra.mxu0 %v841
    %1435 = vmatpush.msra.mxu0 %v837
    %1436 = vmatpush.msra.mxu0 %v833
    %1437 = vmatpush.msra.mxu0 %v829
    %1438 = vmatmul.f32.gmra.mxu0 %v694
    %v1439 = vpop.f32.mrf.mxu0
    %v1440 = vadd.f32 %v1420, %v1439
    %1441 = vdwg.mxu0
    %1442 = vmatpush.msra.mxu0 %v953
    %1443 = vmatpush.msra.mxu0 %v949
    %1444 = vmatpush.msra.mxu0 %v945
    %1445 = vmatpush.msra.mxu0 %v941
    %1446 = vmatpush.msra.mxu0 %v937
    %1447 = vmatpush.msra.mxu0 %v933
    %1448 = vmatpush.msra.mxu0 %v929
    %1449 = vmatpush.msra.mxu0 %v925
    %1450 = vmatpush.msra.mxu0 %v921
    %1451 = vmatpush.msra.mxu0 %v917
    %1452 = vmatpush.msra.mxu0 %v913
    %1453 = vmatpush.msra.mxu0 %v909
    %1454 = vmatpush.msra.mxu0 %v905
    %1455 = vmatpush.msra.mxu0 %v901
    %1456 = vmatpush.msra.mxu0 %v897
    %1457 = vmatpush.msra.mxu0 %v893
    %1458 = vmatmul.f32.gmra.mxu0 %v695
    %v1459 = vpop.f32.mrf.mxu0
    %v1460 = vadd.f32 %v1440, %v1459
    %1461 = vdwg.mxu0
    %1462 = vmatpush.msra.mxu0 %v1017
    %1463 = vmatpush.msra.mxu0 %v1013
    %1464 = vmatpush.msra.mxu0 %v1009
    %1465 = vmatpush.msra.mxu0 %v1005
    %1466 = vmatpush.msra.mxu0 %v1001
    %1467 = vmatpush.msra.mxu0 %v997
    %1468 = vmatpush.msra.mxu0 %v993
    %1469 = vmatpush.msra.mxu0 %v989
    %1470 = vmatpush.msra.mxu0 %v985
    %1471 = vmatpush.msra.mxu0 %v981
    %1472 = vmatpush.msra.mxu0 %v977
    %1473 = vmatpush.msra.mxu0 %v973
    %1474 = vmatpush.msra.mxu0 %v969
    %1475 = vmatpush.msra.mxu0 %v965
    %1476 = vmatpush.msra.mxu0 %v961
    %1477 = vmatpush.msra.mxu0 %v957
    %1478 = vmatmul.f32.gmra.mxu0 %v696
    %v1479 = vpop.f32.mrf.mxu0
    %v1480 = vadd.f32 %v1460, %v1479
    %1481 = vdwg.mxu0
    %1482 = vmatpush.msra.mxu0 %v1081
    %1483 = vmatpush.msra.mxu0 %v1077
    %1484 = vmatpush.msra.mxu0 %v1073
    %1485 = vmatpush.msra.mxu0 %v1069
    %1486 = vmatpush.msra.mxu0 %v1065
    %1487 = vmatpush.msra.mxu0 %v1061
    %1488 = vmatpush.msra.mxu0 %v1057
    %1489 = vmatpush.msra.mxu0 %v1053
    %1490 = vmatpush.msra.mxu0 %v1049
    %1491 = vmatpush.msra.mxu0 %v1045
    %1492 = vmatpush.msra.mxu0 %v1041
    %1493 = vmatpush.msra.mxu0 %v1037
    %1494 = vmatpush.msra.mxu0 %v1033
    %1495 = vmatpush.msra.mxu0 %v1029
    %1496 = vmatpush.msra.mxu0 %v1025
    %1497 = vmatpush.msra.mxu0 %v1021
    %1498 = vmatmul.f32.gmra.mxu0 %v697
    %v1499 = vpop.f32.mrf.mxu0
    %v1500 = vadd.f32 %v1480, %v1499
    %1501 = vdwg.mxu0
    %1502 = vmatpush.msra.mxu0 %v1145
    %1503 = vmatpush.msra.mxu0 %v1141
    %1504 = vmatpush.msra.mxu0 %v1137
    %1505 = vmatpush.msra.mxu0 %v1133
    %1506 = vmatpush.msra.mxu0 %v1129
    %1507 = vmatpush.msra.mxu0 %v1125
    %1508 = vmatpush.msra.mxu0 %v1121
    %1509 = vmatpush.msra.mxu0 %v1117
    %1510 = vmatpush.msra.mxu0 %v1113
    %1511 = vmatpush.msra.mxu0 %v1109
    %1512 = vmatpush.msra.mxu0 %v1105
    %1513 = vmatpush.msra.mxu0 %v1101
    %1514 = vmatpush.msra.mxu0 %v1097
    %1515 = vmatpush.msra.mxu0 %v1093
    %1516 = vmatpush.msra.mxu0 %v1089
    %1517 = vmatpush.msra.mxu0 %v1085
    %1518 = vmatmul.f32.gmra.mxu0 %v698
    %v1519 = vpop.f32.mrf.mxu0
    %v1520 = vadd.f32 %v1500, %v1519
    %1521 = vdwg.mxu0
    %1522 = vmatpush.msra.mxu0 %v1209
    %1523 = vmatpush.msra.mxu0 %v1205
    %1524 = vmatpush.msra.mxu0 %v1201
    %1525 = vmatpush.msra.mxu0 %v1197
    %1526 = vmatpush.msra.mxu0 %v1193
    %1527 = vmatpush.msra.mxu0 %v1189
    %1528 = vmatpush.msra.mxu0 %v1185
    %1529 = vmatpush.msra.mxu0 %v1181
    %1530 = vmatpush.msra.mxu0 %v1177
    %1531 = vmatpush.msra.mxu0 %v1173
    %1532 = vmatpush.msra.mxu0 %v1169
    %1533 = vmatpush.msra.mxu0 %v1165
    %1534 = vmatpush.msra.mxu0 %v1161
    %1535 = vmatpush.msra.mxu0 %v1157
    %1536 = vmatpush.msra.mxu0 %v1153
    %1537 = vmatpush.msra.mxu0 %v1149
    %1538 = vmatmul.f32.gmra.mxu0 %v699
    %v1539 = vpop.f32.mrf.mxu0
    %v1540 = vadd.f32 %v1520, %v1539
    %1541 = vdwg.mxu0
    %1542 = vmatpush.msra.mxu0 %v762
    %1543 = vmatpush.msra.mxu0 %v758
    %1544 = vmatpush.msra.mxu0 %v754
    %1545 = vmatpush.msra.mxu0 %v750
    %1546 = vmatpush.msra.mxu0 %v746
    %1547 = vmatpush.msra.mxu0 %v742
    %1548 = vmatpush.msra.mxu0 %v738
    %1549 = vmatpush.msra.mxu0 %v734
    %1550 = vmatpush.msra.mxu0 %v730
    %1551 = vmatpush.msra.mxu0 %v726
    %1552 = vmatpush.msra.mxu0 %v722
    %1553 = vmatpush.msra.mxu0 %v718
    %1554 = vmatpush.msra.mxu0 %v714
    %1555 = vmatpush.msra.mxu0 %v710
    %1556 = vmatpush.msra.mxu0 %v706
    %1557 = vmatpush.msra.mxu0 %v702
    %1558 = vmatmul.f32.gmra.mxu0 %v692
    %v1559 = vpop.f32.mrf.mxu0
    %v1560 = vadd.f32 %v1216, %v1559
    %1561 = vdwg.mxu0
    %1562 = vmatpush.msra.mxu0 %v826
    %1563 = vmatpush.msra.mxu0 %v822
    %1564 = vmatpush.msra.mxu0 %v818
    %1565 = vmatpush.msra.mxu0 %v814
    %1566 = vmatpush.msra.mxu0 %v810
    %1567 = vmatpush.msra.mxu0 %v806
    %1568 = vmatpush.msra.mxu0 %v802
    %1569 = vmatpush.msra.mxu0 %v798
    %1570 = vmatpush.msra.mxu0 %v794
    %1571 = vmatpush.msra.mxu0 %v790
    %1572 = vmatpush.msra.mxu0 %v786
    %1573 = vmatpush.msra.mxu0 %v782
    %1574 = vmatpush.msra.mxu0 %v778
    %1575 = vmatpush.msra.mxu0 %v774
    %1576 = vmatpush.msra.mxu0 %v770
    %1577 = vmatpush.msra.mxu0 %v766
    %1578 = vmatmul.f32.gmra.mxu0 %v693
    %v1579 = vpop.f32.mrf.mxu0
    %v1580 = vadd.f32 %v1560, %v1579
    %1581 = vdwg.mxu0
    %1582 = vmatpush.msra.mxu0 %v890
    %1583 = vmatpush.msra.mxu0 %v886
    %1584 = vmatpush.msra.mxu0 %v882
    %1585 = vmatpush.msra.mxu0 %v878
    %1586 = vmatpush.msra.mxu0 %v874
    %1587 = vmatpush.msra.mxu0 %v870
    %1588 = vmatpush.msra.mxu0 %v866
    %1589 = vmatpush.msra.mxu0 %v862
    %1590 = vmatpush.msra.mxu0 %v858
    %1591 = vmatpush.msra.mxu0 %v854
    %1592 = vmatpush.msra.mxu0 %v850
    %1593 = vmatpush.msra.mxu0 %v846
    %1594 = vmatpush.msra.mxu0 %v842
    %1595 = vmatpush.msra.mxu0 %v838
    %1596 = vmatpush.msra.mxu0 %v834
    %1597 = vmatpush.msra.mxu0 %v830
    %1598 = vmatmul.f32.gmra.mxu0 %v694
    %v1599 = vpop.f32.mrf.mxu0
    %v1600 = vadd.f32 %v1580, %v1599
    %1601 = vdwg.mxu0
    %1602 = vmatpush.msra.mxu0 %v954
    %1603 = vmatpush.msra.mxu0 %v950
    %1604 = vmatpush.msra.mxu0 %v946
    %1605 = vmatpush.msra.mxu0 %v942
    %1606 = vmatpush.msra.mxu0 %v938
    %1607 = vmatpush.msra.mxu0 %v934
    %1608 = vmatpush.msra.mxu0 %v930
    %1609 = vmatpush.msra.mxu0 %v926
    %1610 = vmatpush.msra.mxu0 %v922
    %1611 = vmatpush.msra.mxu0 %v918
    %1612 = vmatpush.msra.mxu0 %v914
    %1613 = vmatpush.msra.mxu0 %v910
    %1614 = vmatpush.msra.mxu0 %v906
    %1615 = vmatpush.msra.mxu0 %v902
    %1616 = vmatpush.msra.mxu0 %v898
    %1617 = vmatpush.msra.mxu0 %v894
    %1618 = vmatmul.f32.gmra.mxu0 %v695
    %v1619 = vpop.f32.mrf.mxu0
    %v1620 = vadd.f32 %v1600, %v1619
    %1621 = vdwg.mxu0
    %1622 = vmatpush.msra.mxu0 %v1018
    %1623 = vmatpush.msra.mxu0 %v1014
    %1624 = vmatpush.msra.mxu0 %v1010
    %1625 = vmatpush.msra.mxu0 %v1006
    %1626 = vmatpush.msra.mxu0 %v1002
    %1627 = vmatpush.msra.mxu0 %v998
    %1628 = vmatpush.msra.mxu0 %v994
    %1629 = vmatpush.msra.mxu0 %v990
    %1630 = vmatpush.msra.mxu0 %v986
    %1631 = vmatpush.msra.mxu0 %v982
    %1632 = vmatpush.msra.mxu0 %v978
    %1633 = vmatpush.msra.mxu0 %v974
    %1634 = vmatpush.msra.mxu0 %v970
    %1635 = vmatpush.msra.mxu0 %v966
    %1636 = vmatpush.msra.mxu0 %v962
    %1637 = vmatpush.msra.mxu0 %v958
    %1638 = vmatmul.f32.gmra.mxu0 %v696
    %v1639 = vpop.f32.mrf.mxu0
    %v1640 = vadd.f32 %v1620, %v1639
    %1641 = vdwg.mxu0
    %1642 = vmatpush.msra.mxu0 %v1082
    %1643 = vmatpush.msra.mxu0 %v1078
    %1644 = vmatpush.msra.mxu0 %v1074
    %1645 = vmatpush.msra.mxu0 %v1070
    %1646 = vmatpush.msra.mxu0 %v1066
    %1647 = vmatpush.msra.mxu0 %v1062
    %1648 = vmatpush.msra.mxu0 %v1058
    %1649 = vmatpush.msra.mxu0 %v1054
    %1650 = vmatpush.msra.mxu0 %v1050
    %1651 = vmatpush.msra.mxu0 %v1046
    %1652 = vmatpush.msra.mxu0 %v1042
    %1653 = vmatpush.msra.mxu0 %v1038
    %1654 = vmatpush.msra.mxu0 %v1034
    %1655 = vmatpush.msra.mxu0 %v1030
    %1656 = vmatpush.msra.mxu0 %v1026
    %1657 = vmatpush.msra.mxu0 %v1022
    %1658 = vmatmul.f32.gmra.mxu0 %v697
    %v1659 = vpop.f32.mrf.mxu0
    %v1660 = vadd.f32 %v1640, %v1659
    %1661 = vdwg.mxu0
    %1662 = vmatpush.msra.mxu0 %v1146
    %1663 = vmatpush.msra.mxu0 %v1142
    %1664 = vmatpush.msra.mxu0 %v1138
    %1665 = vmatpush.msra.mxu0 %v1134
    %1666 = vmatpush.msra.mxu0 %v1130
    %1667 = vmatpush.msra.mxu0 %v1126
    %1668 = vmatpush.msra.mxu0 %v1122
    %1669 = vmatpush.msra.mxu0 %v1118
    %1670 = vmatpush.msra.mxu0 %v1114
    %1671 = vmatpush.msra.mxu0 %v1110
    %1672 = vmatpush.msra.mxu0 %v1106
    %1673 = vmatpush.msra.mxu0 %v1102
    %1674 = vmatpush.msra.mxu0 %v1098
    %1675 = vmatpush.msra.mxu0 %v1094
    %1676 = vmatpush.msra.mxu0 %v1090
    %1677 = vmatpush.msra.mxu0 %v1086
    %1678 = vmatmul.f32.gmra.mxu0 %v698
    %v1679 = vpop.f32.mrf.mxu0
    %v1680 = vadd.f32 %v1660, %v1679
    %1681 = vdwg.mxu0
    %1682 = vmatpush.msra.mxu0 %v1210
    %1683 = vmatpush.msra.mxu0 %v1206
    %1684 = vmatpush.msra.mxu0 %v1202
    %1685 = vmatpush.msra.mxu0 %v1198
    %1686 = vmatpush.msra.mxu0 %v1194
    %1687 = vmatpush.msra.mxu0 %v1190
    %1688 = vmatpush.msra.mxu0 %v1186
    %1689 = vmatpush.msra.mxu0 %v1182
    %1690 = vmatpush.msra.mxu0 %v1178
    %1691 = vmatpush.msra.mxu0 %v1174
    %1692 = vmatpush.msra.mxu0 %v1170
    %1693 = vmatpush.msra.mxu0 %v1166
    %1694 = vmatpush.msra.mxu0 %v1162
    %1695 = vmatpush.msra.mxu0 %v1158
    %1696 = vmatpush.msra.mxu0 %v1154
    %1697 = vmatpush.msra.mxu0 %v1150
    %1698 = vmatmul.f32.gmra.mxu0 %v699
    %v1699 = vpop.f32.mrf.mxu0
    %v1700 = vadd.f32 %v1680, %v1699
    %1701 = vdwg.mxu0
    %1702 = vmatpush.msra.mxu0 %v763
    %1703 = vmatpush.msra.mxu0 %v759
    %1704 = vmatpush.msra.mxu0 %v755
    %1705 = vmatpush.msra.mxu0 %v751
    %1706 = vmatpush.msra.mxu0 %v747
    %1707 = vmatpush.msra.mxu0 %v743
    %1708 = vmatpush.msra.mxu0 %v739
    %1709 = vmatpush.msra.mxu0 %v735
    %1710 = vmatpush.msra.mxu0 %v731
    %1711 = vmatpush.msra.mxu0 %v727
    %1712 = vmatpush.msra.mxu0 %v723
    %1713 = vmatpush.msra.mxu0 %v719
    %1714 = vmatpush.msra.mxu0 %v715
    %1715 = vmatpush.msra.mxu0 %v711
    %1716 = vmatpush.msra.mxu0 %v707
    %1717 = vmatpush.msra.mxu0 %v703
    %1718 = vmatmul.f32.gmra.mxu0 %v692
    %v1719 = vpop.f32.mrf.mxu0
    %v1720 = vadd.f32 %v1217, %v1719
    %1721 = vdwg.mxu0
    %1722 = vmatpush.msra.mxu0 %v827
    %1723 = vmatpush.msra.mxu0 %v823
    %1724 = vmatpush.msra.mxu0 %v819
    %1725 = vmatpush.msra.mxu0 %v815
    %1726 = vmatpush.msra.mxu0 %v811
    %1727 = vmatpush.msra.mxu0 %v807
    %1728 = vmatpush.msra.mxu0 %v803
    %1729 = vmatpush.msra.mxu0 %v799
    %1730 = vmatpush.msra.mxu0 %v795
    %1731 = vmatpush.msra.mxu0 %v791
    %1732 = vmatpush.msra.mxu0 %v787
    %1733 = vmatpush.msra.mxu0 %v783
    %1734 = vmatpush.msra.mxu0 %v779
    %1735 = vmatpush.msra.mxu0 %v775
    %1736 = vmatpush.msra.mxu0 %v771
    %1737 = vmatpush.msra.mxu0 %v767
    %1738 = vmatmul.f32.gmra.mxu0 %v693
    %v1739 = vpop.f32.mrf.mxu0
    %v1740 = vadd.f32 %v1720, %v1739
    %1741 = vdwg.mxu0
    %1742 = vmatpush.msra.mxu0 %v891
    %1743 = vmatpush.msra.mxu0 %v887
    %1744 = vmatpush.msra.mxu0 %v883
    %1745 = vmatpush.msra.mxu0 %v879
    %1746 = vmatpush.msra.mxu0 %v875
    %1747 = vmatpush.msra.mxu0 %v871
    %1748 = vmatpush.msra.mxu0 %v867
    %1749 = vmatpush.msra.mxu0 %v863
    %1750 = vmatpush.msra.mxu0 %v859
    %1751 = vmatpush.msra.mxu0 %v855
    %1752 = vmatpush.msra.mxu0 %v851
    %1753 = vmatpush.msra.mxu0 %v847
    %1754 = vmatpush.msra.mxu0 %v843
    %1755 = vmatpush.msra.mxu0 %v839
    %1756 = vmatpush.msra.mxu0 %v835
    %1757 = vmatpush.msra.mxu0 %v831
    %1758 = vmatmul.f32.gmra.mxu0 %v694
    %v1759 = vpop.f32.mrf.mxu0
    %v1760 = vadd.f32 %v1740, %v1759
    %1761 = vdwg.mxu0
    %1762 = vmatpush.msra.mxu0 %v955
    %1763 = vmatpush.msra.mxu0 %v951
    %1764 = vmatpush.msra.mxu0 %v947
    %1765 = vmatpush.msra.mxu0 %v943
    %1766 = vmatpush.msra.mxu0 %v939
    %1767 = vmatpush.msra.mxu0 %v935
    %1768 = vmatpush.msra.mxu0 %v931
    %1769 = vmatpush.msra.mxu0 %v927
    %1770 = vmatpush.msra.mxu0 %v923
    %1771 = vmatpush.msra.mxu0 %v919
    %1772 = vmatpush.msra.mxu0 %v915
    %1773 = vmatpush.msra.mxu0 %v911
    %1774 = vmatpush.msra.mxu0 %v907
    %1775 = vmatpush.msra.mxu0 %v903
    %1776 = vmatpush.msra.mxu0 %v899
    %1777 = vmatpush.msra.mxu0 %v895
    %1778 = vmatmul.f32.gmra.mxu0 %v695
    %v1779 = vpop.f32.mrf.mxu0
    %v1780 = vadd.f32 %v1760, %v1779
    %1781 = vdwg.mxu0
    %1782 = vmatpush.msra.mxu0 %v1019
    %1783 = vmatpush.msra.mxu0 %v1015
    %1784 = vmatpush.msra.mxu0 %v1011
    %1785 = vmatpush.msra.mxu0 %v1007
    %1786 = vmatpush.msra.mxu0 %v1003
    %1787 = vmatpush.msra.mxu0 %v999
    %1788 = vmatpush.msra.mxu0 %v995
    %1789 = vmatpush.msra.mxu0 %v991
    %1790 = vmatpush.msra.mxu0 %v987
    %1791 = vmatpush.msra.mxu0 %v983
    %1792 = vmatpush.msra.mxu0 %v979
    %1793 = vmatpush.msra.mxu0 %v975
    %1794 = vmatpush.msra.mxu0 %v971
    %1795 = vmatpush.msra.mxu0 %v967
    %1796 = vmatpush.msra.mxu0 %v963
    %1797 = vmatpush.msra.mxu0 %v959
    %1798 = vmatmul.f32.gmra.mxu0 %v696
    %v1799 = vpop.f32.mrf.mxu0
    %v1800 = vadd.f32 %v1780, %v1799
    %1801 = vdwg.mxu0
    %1802 = vmatpush.msra.mxu0 %v1083
    %1803 = vmatpush.msra.mxu0 %v1079
    %1804 = vmatpush.msra.mxu0 %v1075
    %1805 = vmatpush.msra.mxu0 %v1071
    %1806 = vmatpush.msra.mxu0 %v1067
    %1807 = vmatpush.msra.mxu0 %v1063
    %1808 = vmatpush.msra.mxu0 %v1059
    %1809 = vmatpush.msra.mxu0 %v1055
    %1810 = vmatpush.msra.mxu0 %v1051
    %1811 = vmatpush.msra.mxu0 %v1047
    %1812 = vmatpush.msra.mxu0 %v1043
    %1813 = vmatpush.msra.mxu0 %v1039
    %1814 = vmatpush.msra.mxu0 %v1035
    %1815 = vmatpush.msra.mxu0 %v1031
    %1816 = vmatpush.msra.mxu0 %v1027
    %1817 = vmatpush.msra.mxu0 %v1023
    %1818 = vmatmul.f32.gmra.mxu0 %v697
    %v1819 = vpop.f32.mrf.mxu0
    %v1820 = vadd.f32 %v1800, %v1819
    %1821 = vdwg.mxu0
    %1822 = vmatpush.msra.mxu0 %v1147
    %1823 = vmatpush.msra.mxu0 %v1143
    %1824 = vmatpush.msra.mxu0 %v1139
    %1825 = vmatpush.msra.mxu0 %v1135
    %1826 = vmatpush.msra.mxu0 %v1131
    %1827 = vmatpush.msra.mxu0 %v1127
    %1828 = vmatpush.msra.mxu0 %v1123
    %1829 = vmatpush.msra.mxu0 %v1119
    %1830 = vmatpush.msra.mxu0 %v1115
    %1831 = vmatpush.msra.mxu0 %v1111
    %1832 = vmatpush.msra.mxu0 %v1107
    %1833 = vmatpush.msra.mxu0 %v1103
    %1834 = vmatpush.msra.mxu0 %v1099
    %1835 = vmatpush.msra.mxu0 %v1095
    %1836 = vmatpush.msra.mxu0 %v1091
    %1837 = vmatpush.msra.mxu0 %v1087
    %1838 = vmatmul.f32.gmra.mxu0 %v698
    %v1839 = vpop.f32.mrf.mxu0
    %v1840 = vadd.f32 %v1820, %v1839
    %1841 = vdwg.mxu0
    %1842 = vmatpush.msra.mxu0 %v1211
    %1843 = vmatpush.msra.mxu0 %v1207
    %1844 = vmatpush.msra.mxu0 %v1203
    %1845 = vmatpush.msra.mxu0 %v1199
    %1846 = vmatpush.msra.mxu0 %v1195
    %1847 = vmatpush.msra.mxu0 %v1191
    %1848 = vmatpush.msra.mxu0 %v1187
    %1849 = vmatpush.msra.mxu0 %v1183
    %1850 = vmatpush.msra.mxu0 %v1179
    %1851 = vmatpush.msra.mxu0 %v1175
    %1852 = vmatpush.msra.mxu0 %v1171
    %1853 = vmatpush.msra.mxu0 %v1167
    %1854 = vmatpush.msra.mxu0 %v1163
    %1855 = vmatpush.msra.mxu0 %v1159
    %1856 = vmatpush.msra.mxu0 %v1155
    %1857 = vmatpush.msra.mxu0 %v1151
    %1858 = vmatmul.f32.gmra.mxu0 %v699
    %v1859 = vpop.f32.mrf.mxu0
    %v1860 = vadd.f32 %v1840, %v1859
    %1861 = vdwg.mxu0
    %v1862 = vmax.f32 %v1380, 0.0
    %v1863 = vmax.f32 %v1540, 0.0
    %v1864 = vmax.f32 %v1700, 0.0
    %v1865 = vmax.f32 %v1860, 0.0
    %v1866 = vld [vmem:[%s7] sm:$0xff]
    %v1867 = vld [vmem:[%s7 + $0x8] sm:$0xff]
    %v1868 = vld [vmem:[%s7 + $0x10] sm:$0xff]
    %v1869 = vld [vmem:[%s7 + $0x18] sm:$0xff]
    %v1870 = vld [vmem:[%s7 + $0x20] sm:$0xff]
    %v1871 = vld [vmem:[%s7 + $0x28] sm:$0xff]
    %v1872 = vld [vmem:[%s7 + $0x30] sm:$0xff]
    %v1873 = vld [vmem:[%s7 + $0x38] sm:$0xff]
    %v1874 = vld [vmem:[%s7 + $0x40] sm:$0xff]
    %v1875 = vld [vmem:[%s7 + $0x48] sm:$0xff]
    %v1876 = vld [vmem:[%s7 + $0x50] sm:$0xff]
    %v1877 = vld [vmem:[%s7 + $0x58] sm:$0xff]
    %v1878 = vld [vmem:[%s7 + $0x60] sm:$0xff]
    %v1879 = vld [vmem:[%s7 + $0x68] sm:$0xff]
    %v1880 = vld [vmem:[%s7 + $0x70] sm:$0xff]
    %v1881 = vld [vmem:[%s7 + $0x78] sm:$0xff]
    %v1882 = vld [vmem:[%s7 + $0x80] sm:$0xff]
    %v1883 = vld [vmem:[%s7 + $0x88] sm:$0xff]
    %v1884 = vld [vmem:[%s7 + $0x90] sm:$0xff]
    %v1885 = vld [vmem:[%s7 + $0x98] sm:$0xff]
    %v1886 = vld [vmem:[%s7 + $0xa0] sm:$0xff]
    %v1887 = vld [vmem:[%s7 + $0xa8] sm:$0xff]
    %v1888 = vld [vmem:[%s7 + $0xb0] sm:$0xff]
    %v1889 = vld [vmem:[%s7 + $0xb8] sm:$0xff]
    %v1890 = vld [vmem:[%s7 + $0xc0] sm:$0xff]
    %v1891 = vld [vmem:[%s7 + $0xc8] sm:$0xff]
    %v1892 = vld [vmem:[%s7 + $0xd0] sm:$0xff]
    %v1893 = vld [vmem:[%s7 + $0xd8] sm:$0xff]
    %v1894 = vld [vmem:[%s7 + $0xe0] sm:$0xff]
    %v1895 = vld [vmem:[%s7 + $0xe8] sm:$0xff]
    %v1896 = vld [vmem:[%s7 + $0xf0] sm:$0xff]
    %v1897 = vld [vmem:[%s7 + $0xf8] sm:$0xff]
    %v1898 = vld [vmem:[%s7 + $0x100] sm:$0xff]
    %v1899 = vld [vmem:[%s7 + $0x108] sm:$0xff]
    %v1900 = vld [vmem:[%s7 + $0x110] sm:$0xff]
    %v1901 = vld [vmem:[%s7 + $0x118] sm:$0xff]
    %v1902 = vld [vmem:[%s7 + $0x120] sm:$0xff]
    %v1903 = vld [vmem:[%s7 + $0x128] sm:$0xff]
    %v1904 = vld [vmem:[%s7 + $0x130] sm:$0xff]
    %v1905 = vld [vmem:[%s7 + $0x138] sm:$0xff]
    %v1906 = vld [vmem:[%s7 + $0x140] sm:$0xff]
    %v1907 = vld [vmem:[%s7 + $0x148] sm:$0xff]
    %v1908 = vld [vmem:[%s7 + $0x150] sm:$0xff]
    %v1909 = vld [vmem:[%s7 + $0x158] sm:$0xff]
    %v1910 = vld [vmem:[%s7 + $0x160] sm:$0xff]
    %v1911 = vld [vmem:[%s7 + $0x168] sm:$0xff]
    %v1912 = vld [vmem:[%s7 + $0x170] sm:$0xff]
    %v1913 = vld [vmem:[%s7 + $0x178] sm:$0xff]
    %v1914 = vld [vmem:[%s7 + $0x180] sm:$0xff]
    %v1915 = vld [vmem:[%s7 + $0x188] sm:$0xff]
    %v1916 = vld [vmem:[%s7 + $0x190] sm:$0xff]
    %v1917 = vld [vmem:[%s7 + $0x198] sm:$0xff]
    %v1918 = vld [vmem:[%s7 + $0x1a0] sm:$0xff]
    %v1919 = vld [vmem:[%s7 + $0x1a8] sm:$0xff]
    %v1920 = vld [vmem:[%s7 + $0x1b0] sm:$0xff]
    %v1921 = vld [vmem:[%s7 + $0x1b8] sm:$0xff]
    %v1922 = vld [vmem:[%s7 + $0x1c0] sm:$0xff]
    %v1923 = vld [vmem:[%s7 + $0x1c8] sm:$0xff]
    %v1924 = vld [vmem:[%s7 + $0x1d0] sm:$0xff]
    %v1925 = vld [vmem:[%s7 + $0x1d8] sm:$0xff]
    %v1926 = vld [vmem:[%s7 + $0x1e0] sm:$0xff]
    %v1927 = vld [vmem:[%s7 + $0x1e8] sm:$0xff]
    %v1928 = vld [vmem:[%s7 + $0x1f0] sm:$0xff]
    %v1929 = vld [vmem:[%s7 + $0x1f8] sm:$0xff]
    %v1930 = vld [vmem:[#allocation14] sm:$0x1]
    %v1932 = vperm.slane %v1930, 0
    %1934 = vmatpush.msra.mxu0 %v1881
    %1935 = vmatpush.msra.mxu0 %v1880
    %1936 = vmatpush.msra.mxu0 %v1879
    %1937 = vmatpush.msra.mxu0 %v1878
    %1938 = vmatpush.msra.mxu0 %v1877
    %1939 = vmatpush.msra.mxu0 %v1876
    %1940 = vmatpush.msra.mxu0 %v1875
    %1941 = vmatpush.msra.mxu0 %v1874
    %1942 = vmatpush.msra.mxu0 %v1873
    %1943 = vmatpush.msra.mxu0 %v1872
    %1944 = vmatpush.msra.mxu0 %v1871
    %1945 = vmatpush.msra.mxu0 %v1870
    %1946 = vmatpush.msra.mxu0 %v1869
    %1947 = vmatpush.msra.mxu0 %v1868
    %1948 = vmatpush.msra.mxu0 %v1867
    %1949 = vmatpush.msra.mxu0 %v1866
    %1950 = vmatmul.f32.gmra.mxu0 %v1862
    %v1951 = vpop.f32.mrf.mxu0
    %v1952 = vadd.f32 %v1932, %v1951
    %1953 = vdwg.mxu0
    %1954 = vmatpush.msra.mxu0 %v1897
    %1955 = vmatpush.msra.mxu0 %v1896
    %1956 = vmatpush.msra.mxu0 %v1895
    %1957 = vmatpush.msra.mxu0 %v1894
    %1958 = vmatpush.msra.mxu0 %v1893
    %1959 = vmatpush.msra.mxu0 %v1892
    %1960 = vmatpush.msra.mxu0 %v1891
    %1961 = vmatpush.msra.mxu0 %v1890
    %1962 = vmatpush.msra.mxu0 %v1889
    %1963 = vmatpush.msra.mxu0 %v1888
    %1964 = vmatpush.msra.mxu0 %v1887
    %1965 = vmatpush.msra.mxu0 %v1886
    %1966 = vmatpush.msra.mxu0 %v1885
    %1967 = vmatpush.msra.mxu0 %v1884
    %1968 = vmatpush.msra.mxu0 %v1883
    %1969 = vmatpush.msra.mxu0 %v1882
    %1970 = vmatmul.f32.gmra.mxu0 %v1863
    %v1971 = vpop.f32.mrf.mxu0
    %v1972 = vadd.f32 %v1952, %v1971
    %1973 = vdwg.mxu0
    %1974 = vmatpush.msra.mxu0 %v1913
    %1975 = vmatpush.msra.mxu0 %v1912
    %1976 = vmatpush.msra.mxu0 %v1911
    %1977 = vmatpush.msra.mxu0 %v1910
    %1978 = vmatpush.msra.mxu0 %v1909
    %1979 = vmatpush.msra.mxu0 %v1908
    %1980 = vmatpush.msra.mxu0 %v1907
    %1981 = vmatpush.msra.mxu0 %v1906
    %1982 = vmatpush.msra.mxu0 %v1905
    %1983 = vmatpush.msra.mxu0 %v1904
    %1984 = vmatpush.msra.mxu0 %v1903
    %1985 = vmatpush.msra.mxu0 %v1902
    %1986 = vmatpush.msra.mxu0 %v1901
    %1987 = vmatpush.msra.mxu0 %v1900
    %1988 = vmatpush.msra.mxu0 %v1899
    %1989 = vmatpush.msra.mxu0 %v1898
    %1990 = vmatmul.f32.gmra.mxu0 %v1864
    %v1991 = vpop.f32.mrf.mxu0
    %v1992 = vadd.f32 %v1972, %v1991
    %1993 = vdwg.mxu0
    %1994 = vmatpush.msra.mxu0 %v1929
    %1995 = vmatpush.msra.mxu0 %v1928
    %1996 = vmatpush.msra.mxu0 %v1927
    %1997 = vmatpush.msra.mxu0 %v1926
    %1998 = vmatpush.msra.mxu0 %v1925
    %1999 = vmatpush.msra.mxu0 %v1924
    %2000 = vmatpush.msra.mxu0 %v1923
    %2001 = vmatpush.msra.mxu0 %v1922
    %2002 = vmatpush.msra.mxu0 %v1921
    %2003 = vmatpush.msra.mxu0 %v1920
    %2004 = vmatpush.msra.mxu0 %v1919
    %2005 = vmatpush.msra.mxu0 %v1918
    %2006 = vmatpush.msra.mxu0 %v1917
    %2007 = vmatpush.msra.mxu0 %v1916
    %2008 = vmatpush.msra.mxu0 %v1915
    %2009 = vmatpush.msra.mxu0 %v1914
    %2010 = vmatmul.f32.gmra.mxu0 %v1865
    %v2011 = vpop.f32.mrf.mxu0
    %v2012 = vadd.f32 %v1992, %v2011
    %2013 = vdwg.mxu0
    %vm2014 = vcmask 261120
    %2015 = vst.msk [vmem:[#allocation16] sm:$0xff] %vm2014, %v2012
    // Predicated region
    $region70: #{tpu_custom_call.1} parent=1 // pred_check
      _
    $region71: #{tpu_custom_call.1} parent=1 // pred_check_branch
      %2017 = sbr.rel (0) target = $region73
    $region72: #{tpu_custom_call.1} parent=1 // pred_region
      %2019 = vsyncadd [#allocation4], 0
      %s2021 = sshll.u32 [#allocation16], 4
      %s2022 = int_to_ptr.vmem [resolvable:$true] %s2021
      %s2023 = sshll.u32 %s9, 4
      %s2024 = int_to_ptr.hbm [resolvable:$true] %s2023
      %2026 = dma.vmem_to_hbm [thread:$0]  %s2022, 128, %s2024, [#allocation4]
    $region73: #{tpu_custom_call.1} parent=1 // pred_fallthru
      _
    // Predicated region
    $region74: #{tpu_custom_call.1} parent=1 // pred_check
      _
    $region75: #{tpu_custom_call.1} parent=1 // pred_check_branch
      %2028 = sbr.rel (0) target = $region77
    $region76: #{tpu_custom_call.1} parent=1 // pred_region
      %2030 = dma.done [#allocation4], 128
    $region77: #{tpu_custom_call.1} parent=1 // pred_fallthru
      _
    %2031 = vsyncpa [#allocation3], 1
    %2032 = vsyncpa [#allocation6], 1
    %2033 = vsyncpa [#allocation9], 1
    %2034 = vsyncpa [#allocation12], 1
    %2035 = vsyncpa [#allocation15], 1
    %2036 = vsyncpa [#allocation4], 1

</llo_original>
